<compile_context>
chip_gen: v7x
topology: tpu7x:2x2x1
jax: 0.10.0
libtpu: 0.0.40
codegen_flags: <defaults>
</compile_context>

<pallas_src>
import functools
import math

import jax
import jax.numpy as jnp
from jax.experimental import pallas as pl
from jax.experimental.pallas import tpu as pltpu


# ----------------------------------------------------------------------------
# Kernel: grid = (batch_blocks, q_blocks, k_blocks); k axis is the reduction.
# ----------------------------------------------------------------------------
def _flash_attention_kernel(q_ref, k_ref, v_ref, o_ref,
                            m_ref, l_ref, acc_ref, *, scale):
    k_idx = pl.program_id(2)

    @pl.when(k_idx == 0)
    def _init():
        m_ref[...] = jnp.full(m_ref.shape, -jnp.inf, m_ref.dtype)
        l_ref[...] = jnp.zeros(l_ref.shape, l_ref.dtype)
        acc_ref[...] = jnp.zeros(acc_ref.shape, acc_ref.dtype)

    q = q_ref[...]          # (bt, tq, D)
    k = k_ref[...]          # (bt, tk, D)
    v = v_ref[...]          # (bt, tk, Dv)

    # Q @ K^T: contract the last dim of both operands directly on the MXU
    # (no XLU transpose of K), f32 accumulation.
    s = jnp.einsum("bqd,bkd->bqk", q, k,
                   preferred_element_type=jnp.float32) * scale

    # Online (streaming) softmax over the key axis.
    m_prev = m_ref[...]
    m_new = jnp.maximum(m_prev, jnp.max(s, axis=-1, keepdims=True))
    alpha = jnp.exp(m_prev - m_new)
    p = jnp.exp(s - m_new)                                  # (bt, tq, tk) f32

    l_ref[...] = alpha * l_ref[...] + jnp.sum(p, axis=-1, keepdims=True)
    # Second matmul in the input dtype (bf16 fast path when inputs are bf16);
    # the accumulator stays f32.
    acc_ref[...] = alpha * acc_ref[...] + jnp.einsum(
        "bqk,bkd->bqd", p.astype(v.dtype), v,
        preferred_element_type=jnp.float32)
    m_ref[...] = m_new

    @pl.when(k_idx == pl.num_programs(2) - 1)
    def _finalize():
        # Deferred, exact normalization (keeps the 1e-5 reference tolerance).
        o_ref[...] = (acc_ref[...] / l_ref[...]).astype(o_ref.dtype)


# ----------------------------------------------------------------------------
# Tile selection helpers
# ----------------------------------------------------------------------------
def _largest_divisor_leq(n, cap):
    for d in range(min(cap, n), 0, -1):
        if n % d == 0:
            return d
    return 1


def _pick_seq_tile(size, candidates):
    for c in candidates:
        if size >= c and size % c == 0:
            return c
    return size   # full extent (satisfies the (8,128) rule trivially)


# ----------------------------------------------------------------------------
# Wrapper
# ----------------------------------------------------------------------------
def simple_attention(query, key, value):
    """Pallas implementation of SimpleAttention.forward.

    query: (..., Sq, D), key: (..., Sk, D), value: (..., Sk, Dv).
    Returns (..., Sq, Dv); scale is 1/sqrt(D) as in the PyTorch module.
    """
    *lead, sq, d = query.shape
    sk = key.shape[-2]
    dv = value.shape[-1]
    lead = tuple(lead)

    q = query.reshape(-1, sq, d)
    k = key.reshape(-1, sk, d)
    v = value.reshape(-1, sk, dv)
    b = q.shape[0]

    scale = 1.0 / math.sqrt(float(d))
    itemsize = jnp.dtype(query.dtype).itemsize

    # Batch/head elements per grid step: amortize per-step overhead for small
    # per-head tiles; keep bt=1 when a single head's Q tile is already large.
    small = (sq * d * itemsize) <= (64 * 1024)
    bt = _largest_divisor_leq(b, 16 if small else 1)

    # Flash-style sequence tiles: bound the (tq, tk) score tile and let the
    # BlockSpec pipeline stream K/V.  Divisor-only choices avoid ragged tails.
    tq = _pick_seq_tile(sq, (256, 128))
    tk = _pick_seq_tile(sk, (512, 256, 128))

    grid = (b // bt, sq // tq, sk // tk)

    # Generation-safe VMEM budget: double-buffered blocks + f32 scratch.
    blk_bytes = itemsize * bt * (tq * d + tk * d + tk * dv + tq * dv)
    scratch_bytes = 4 * bt * tq * (dv + 2)
    vmem_limit = int(min(max(2 * (2 * blk_bytes + scratch_bytes), 32 << 20),
                         64 << 20))

    cost = pl.CostEstimate(
        flops=2 * b * sq * sk * (d + dv),
        transcendentals=b * sq * sk,
        bytes_accessed=itemsize * b * (sq * d + sk * d + sk * dv + sq * dv),
    )

    out = pl.pallas_call(
        functools.partial(_flash_attention_kernel, scale=scale),
        out_shape=jax.ShapeDtypeStruct((b, sq, dv), query.dtype),
        grid_spec=pltpu.PrefetchScalarGridSpec(
            num_scalar_prefetch=0,
            grid=grid,
            in_specs=[
                pl.BlockSpec((bt, tq, d), lambda bi, qi, ki: (bi, qi, 0)),
                pl.BlockSpec((bt, tk, d), lambda bi, qi, ki: (bi, ki, 0)),
                pl.BlockSpec((bt, tk, dv), lambda bi, qi, ki: (bi, ki, 0)),
            ],
            out_specs=pl.BlockSpec((bt, tq, dv), lambda bi, qi, ki: (bi, qi, 0)),
            scratch_shapes=[
                pltpu.VMEM((bt, tq, 1), jnp.float32),    # running max
                pltpu.VMEM((bt, tq, 1), jnp.float32),    # running denom
                pltpu.VMEM((bt, tq, dv), jnp.float32),   # output accumulator
            ],
        ),
        compiler_params=pltpu.CompilerParams(
            dimension_semantics=("parallel", "parallel", "arbitrary"),
            vmem_limit_bytes=vmem_limit,
        ),
        cost_estimate=cost,
    )(q, k, v)

    return out.reshape(lead + (sq, dv))


# ----------------------------------------------------------------------------
# Pure-JAX reference (mirrors the PyTorch module exactly)
# ----------------------------------------------------------------------------
def reference_attention(query, key, value):
    d = query.shape[-1]
    scores = jnp.einsum("...qd,...kd->...qk", query, key) / jnp.sqrt(
        jnp.asarray(d, jnp.float32))
    weights = jax.nn.softmax(scores, axis=-1)
    return jnp.einsum("...qk,...kd->...qd", weights, value)


if __name__ == "__main__":
    # Small shapes consistent with the module: (batch, heads, seq, embed_dim)
    BATCH = 2
    HEADS = 4
    SEQ = 8
    EMBED_DIM = 32

    rng = jax.random.PRNGKey(0)
    kq, kk, kv = jax.random.split(rng, 3)
    query = jax.random.normal(kq, (BATCH, HEADS, SEQ, EMBED_DIM), jnp.float32)
    key_t = jax.random.normal(kk, (BATCH, HEADS, SEQ, EMBED_DIM), jnp.float32)
    value = jax.random.normal(kv, (BATCH, HEADS, SEQ, EMBED_DIM), jnp.float32)

    out = simple_attention(query, key_t, value)
    out = jax.block_until_ready(out)

    ref = jax.block_until_ready(reference_attention(query, key_t, value))
    assert out.shape == (BATCH, HEADS, SEQ, EMBED_DIM), out.shape
    assert jnp.allclose(out, ref, atol=1e-5, rtol=1e-5), (
        jnp.max(jnp.abs(out - ref))
    )

    print("KERNEL_OK")
</pallas_src>

<mosaic_0001>
module attributes {stable_mosaic.version = 11 : i64} {
  func.func @_flash_attention_kernel(%arg0: i32, %arg1: i32, %arg2: i32, %arg3: memref<8x8x32xf32, #tpu.memory_space<vmem>>, %arg4: memref<8x8x32xf32, #tpu.memory_space<vmem>>, %arg5: memref<8x8x32xf32, #tpu.memory_space<vmem>>, %arg6: memref<8x8x32xf32, #tpu.memory_space<vmem>>, %arg7: memref<8x8x1xf32, #tpu.memory_space<vmem>>, %arg8: memref<8x8x1xf32, #tpu.memory_space<vmem>>, %arg9: memref<8x8x32xf32, #tpu.memory_space<vmem>>) attributes {dimension_semantics = [#tpu.dimension_semantics<parallel>, #tpu.dimension_semantics<parallel>, #tpu.dimension_semantics<arbitrary>], iteration_bounds = array<i64: 1, 1, 1>, scalar_prefetch = 0 : i64, scratch_operands = 3 : i64, tpu.core_type = #tpu.core_type<tc>, window_params = [{transform_indices = @transform_0, window_bounds = array<i64: 8, 8, 32>}, {transform_indices = @transform_1, window_bounds = array<i64: 8, 8, 32>}, {transform_indices = @transform_2, window_bounds = array<i64: 8, 8, 32>}, {transform_indices = @transform_3, window_bounds = array<i64: 8, 8, 32>}]} {
    %c0_i32 = arith.constant 0 : i32
    %0 = arith.cmpi eq, %arg2, %c0_i32 : i32
    %1 = arith.extui %0 : i1 to i32
    %c0_i32_0 = arith.constant 0 : i32
    %2 = arith.cmpi ne, %1, %c0_i32_0 : i32
    scf.if %2 {
      %cst_33 = arith.constant 0xFF800000 : f32
      %34 = vector.broadcast %cst_33 : f32 to vector<8x8x1xf32>
      %c0_34 = arith.constant 0 : index
      %c0_35 = arith.constant 0 : index
      %c0_36 = arith.constant 0 : index
      %35 = vector.load %arg7[%c0_34, %c0_35, %c0_36] : memref<8x8x1xf32, #tpu.memory_space<vmem>>, vector<8x8x1xf32>
      tpu.vector_store %arg7[%c0_34, %c0_35, %c0_36], %34 {strides = array<i32>} : memref<8x8x1xf32, #tpu.memory_space<vmem>>, vector<8x8x1xf32>,
      %cst_37 = arith.constant 0.000000e+00 : f32
      %36 = vector.broadcast %cst_37 : f32 to vector<8x8x1xf32>
      %c0_38 = arith.constant 0 : index
      %c0_39 = arith.constant 0 : index
      %c0_40 = arith.constant 0 : index
      %37 = vector.load %arg8[%c0_38, %c0_39, %c0_40] : memref<8x8x1xf32, #tpu.memory_space<vmem>>, vector<8x8x1xf32>
      tpu.vector_store %arg8[%c0_38, %c0_39, %c0_40], %36 {strides = array<i32>} : memref<8x8x1xf32, #tpu.memory_space<vmem>>, vector<8x8x1xf32>,
      %cst_41 = arith.constant 0.000000e+00 : f32
      %38 = vector.broadcast %cst_41 : f32 to vector<8x8x32xf32>
      %c0_42 = arith.constant 0 : index
      %c0_43 = arith.constant 0 : index
      %c0_44 = arith.constant 0 : index
      %39 = vector.load %arg9[%c0_42, %c0_43, %c0_44] : memref<8x8x32xf32, #tpu.memory_space<vmem>>, vector<8x8x32xf32>
      tpu.vector_store %arg9[%c0_42, %c0_43, %c0_44], %38 {strides = array<i32>} : memref<8x8x32xf32, #tpu.memory_space<vmem>>, vector<8x8x32xf32>,
    } else {
    }
    %c0 = arith.constant 0 : index
    %c0_1 = arith.constant 0 : index
    %c0_2 = arith.constant 0 : index
    %3 = vector.load %arg3[%c0, %c0_1, %c0_2] : memref<8x8x32xf32, #tpu.memory_space<vmem>>, vector<8x8x32xf32>
    %c0_3 = arith.constant 0 : index
    %c0_4 = arith.constant 0 : index
    %c0_5 = arith.constant 0 : index
    %4 = vector.load %arg4[%c0_3, %c0_4, %c0_5] : memref<8x8x32xf32, #tpu.memory_space<vmem>>, vector<8x8x32xf32>
    %c0_6 = arith.constant 0 : index
    %c0_7 = arith.constant 0 : index
    %c0_8 = arith.constant 0 : index
    %5 = vector.load %arg5[%c0_6, %c0_7, %c0_8] : memref<8x8x32xf32, #tpu.memory_space<vmem>>, vector<8x8x32xf32>
    "tpu.trace_start"() <{level = 10 : i32, message = "bqd,bkd->bqk"}> : () -> ()
    %cst = arith.constant dense<0.000000e+00> : vector<8x8x8xf32>
    %6 = tpu.matmul %3, %4, %cst {dimension_numbers = #tpu.dot_dimension_numbers<[2], [2], [1], [1], [0, 0, 0, 1, 1, 1], [0], [0]>} : vector<8x8x32xf32>, vector<8x8x32xf32>, vector<8x8x8xf32> -> vector<8x8x8xf32>
    "tpu.trace_stop"() : () -> ()
    %cst_9 = arith.constant 0.176776692 : f32
    %7 = vector.broadcast %cst_9 : f32 to vector<8x8x8xf32>
    %8 = arith.mulf %6, %7 : vector<8x8x8xf32>
    %c0_10 = arith.constant 0 : index
    %c0_11 = arith.constant 0 : index
    %c0_12 = arith.constant 0 : index
    %9 = vector.load %arg7[%c0_10, %c0_11, %c0_12] : memref<8x8x1xf32, #tpu.memory_space<vmem>>, vector<8x8x1xf32>
    %cst_13 = arith.constant dense<0xFF800000> : vector<8x8xf32>
    %10 = vector.multi_reduction <maximumf>, %8, %cst_13 [2] : vector<8x8x8xf32> to vector<8x8xf32>
    %11 = vector.shape_cast %10 : vector<8x8xf32> to vector<8x8x1xf32>
    %12 = arith.maximumf %9, %11 : vector<8x8x1xf32>
    %13 = arith.subf %9, %12 : vector<8x8x1xf32>
    %14 = math.exp %13 : vector<8x8x1xf32>
    %15 = vector.broadcast %12 : vector<8x8x1xf32> to vector<8x8x8xf32>
    %16 = arith.subf %8, %15 : vector<8x8x8xf32>
    %17 = math.exp %16 : vector<8x8x8xf32>
    %c0_14 = arith.constant 0 : index
    %c0_15 = arith.constant 0 : index
    %c0_16 = arith.constant 0 : index
    %18 = vector.load %arg8[%c0_14, %c0_15, %c0_16] : memref<8x8x1xf32, #tpu.memory_space<vmem>>, vector<8x8x1xf32>
    %19 = arith.mulf %14, %18 : vector<8x8x1xf32>
    %cst_17 = arith.constant dense<0.000000e+00> : vector<8x8xf32>
    %20 = vector.multi_reduction <add>, %17, %cst_17 [2] : vector<8x8x8xf32> to vector<8x8xf32>
    %21 = vector.shape_cast %20 : vector<8x8xf32> to vector<8x8x1xf32>
    %22 = arith.addf %19, %21 : vector<8x8x1xf32>
    %c0_18 = arith.constant 0 : index
    %c0_19 = arith.constant 0 : index
    %c0_20 = arith.constant 0 : index
    %23 = vector.load %arg8[%c0_18, %c0_19, %c0_20] : memref<8x8x1xf32, #tpu.memory_space<vmem>>, vector<8x8x1xf32>
    tpu.vector_store %arg8[%c0_18, %c0_19, %c0_20], %22 {strides = array<i32>} : memref<8x8x1xf32, #tpu.memory_space<vmem>>, vector<8x8x1xf32>,
    %c0_21 = arith.constant 0 : index
    %c0_22 = arith.constant 0 : index
    %c0_23 = arith.constant 0 : index
    %24 = vector.load %arg9[%c0_21, %c0_22, %c0_23] : memref<8x8x32xf32, #tpu.memory_space<vmem>>, vector<8x8x32xf32>
    %25 = vector.broadcast %14 : vector<8x8x1xf32> to vector<8x8x32xf32>
    %26 = arith.mulf %25, %24 : vector<8x8x32xf32>
    "tpu.trace_start"() <{level = 10 : i32, message = "bqk,bkd->bqd"}> : () -> ()
    %cst_24 = arith.constant dense<0.000000e+00> : vector<8x8x32xf32>
    %27 = tpu.matmul %17, %5, %cst_24 {dimension_numbers = #tpu.dot_dimension_numbers<[2], [1], [1], [2], [0, 0, 0, 1, 1, 2], [0], [0]>} : vector<8x8x8xf32>, vector<8x8x32xf32>, vector<8x8x32xf32> -> vector<8x8x32xf32>
    "tpu.trace_stop"() : () -> ()
    %28 = arith.addf %26, %27 : vector<8x8x32xf32>
    %c0_25 = arith.constant 0 : index
    %c0_26 = arith.constant 0 : index
    %c0_27 = arith.constant 0 : index
    %29 = vector.load %arg9[%c0_25, %c0_26, %c0_27] : memref<8x8x32xf32, #tpu.memory_space<vmem>>, vector<8x8x32xf32>
    tpu.vector_store %arg9[%c0_25, %c0_26, %c0_27], %28 {strides = array<i32>} : memref<8x8x32xf32, #tpu.memory_space<vmem>>, vector<8x8x32xf32>,
    %c0_28 = arith.constant 0 : index
    %c0_29 = arith.constant 0 : index
    %c0_30 = arith.constant 0 : index
    %30 = vector.load %arg7[%c0_28, %c0_29, %c0_30] : memref<8x8x1xf32, #tpu.memory_space<vmem>>, vector<8x8x1xf32>
    tpu.vector_store %arg7[%c0_28, %c0_29, %c0_30], %12 {strides = array<i32>} : memref<8x8x1xf32, #tpu.memory_space<vmem>>, vector<8x8x1xf32>,
    %c0_i32_31 = arith.constant 0 : i32
    %31 = arith.cmpi eq, %arg2, %c0_i32_31 : i32
    %32 = arith.extui %31 : i1 to i32
    %c0_i32_32 = arith.constant 0 : i32
    %33 = arith.cmpi ne, %32, %c0_i32_32 : i32
    scf.if %33 {
      %c0_33 = arith.constant 0 : index
      %c0_34 = arith.constant 0 : index
      %c0_35 = arith.constant 0 : index
      %34 = vector.load %arg9[%c0_33, %c0_34, %c0_35] : memref<8x8x32xf32, #tpu.memory_space<vmem>>, vector<8x8x32xf32>
      %c0_36 = arith.constant 0 : index
      %c0_37 = arith.constant 0 : index
      %c0_38 = arith.constant 0 : index
      %35 = vector.load %arg8[%c0_36, %c0_37, %c0_38] : memref<8x8x1xf32, #tpu.memory_space<vmem>>, vector<8x8x1xf32>
      %36 = vector.broadcast %35 : vector<8x8x1xf32> to vector<8x8x32xf32>
      %37 = arith.divf %34, %36 : vector<8x8x32xf32>
      %c0_39 = arith.constant 0 : index
      %c0_40 = arith.constant 0 : index
      %c0_41 = arith.constant 0 : index
      %38 = vector.load %arg6[%c0_39, %c0_40, %c0_41] : memref<8x8x32xf32, #tpu.memory_space<vmem>>, vector<8x8x32xf32>
      tpu.vector_store %arg6[%c0_39, %c0_40, %c0_41], %37 {strides = array<i32>} : memref<8x8x32xf32, #tpu.memory_space<vmem>>, vector<8x8x32xf32>,
    } else {
    }
    return
  }
  func.func @transform_0(%arg0: i32, %arg1: i32, %arg2: i32) -> (i32, i32, i32) {
    %c0_i32 = arith.constant 0 : i32
    %c0_i32_0 = arith.constant 0 : i32
    return %arg0, %arg1, %c0_i32 : i32, i32, i32
  }
  func.func @transform_1(%arg0: i32, %arg1: i32, %arg2: i32) -> (i32, i32, i32) {
    %c0_i32 = arith.constant 0 : i32
    %c0_i32_0 = arith.constant 0 : i32
    return %arg0, %arg2, %c0_i32 : i32, i32, i32
  }
  func.func @transform_2(%arg0: i32, %arg1: i32, %arg2: i32) -> (i32, i32, i32) {
    %c0_i32 = arith.constant 0 : i32
    %c0_i32_0 = arith.constant 0 : i32
    return %arg0, %arg2, %c0_i32 : i32, i32, i32
  }
  func.func @transform_3(%arg0: i32, %arg1: i32, %arg2: i32) -> (i32, i32, i32) {
    %c0_i32 = arith.constant 0 : i32
    %c0_i32_0 = arith.constant 0 : i32
    return %arg0, %arg1, %c0_i32 : i32, i32, i32
  }
}

</mosaic_0001>

<llo_original>
// kernel: tpu_custom_call.1
$region0: #{tpu_custom_call.1}
  #allocation0 [shape = 'u32[]', space=smem, size = 0x4, offset = 0x4, fixed_abs, tag = 'smem constant byte address 0x4 - core index']
  #allocation1 [shape = 'u32[144,128]{1,0:T(1,128)}', space=vmem, size = 0x12000, scoped, tag = 'internal scratch']
  #allocation2 [shape = 'f32[8,8,1]{2,1,0:T(8,128)}', space=vmem, size = 0x8000, scoped, tag = 'scratch operand']
  #allocation3 [shape = 'f32[8,8,1]{2,1,0:T(8,128)}', space=vmem, size = 0x8000, scoped, tag = 'scratch operand']
  #allocation4 [shape = 'f32[8,8,32]{2,1,0:T(8,128)}', space=vmem, size = 0x8000, scoped, tag = 'scratch operand']
  %s0 = inlined_call_operand.hbm [shape: f32[8,8,32], index: 0, kind: input, shape index: {}]
  %s1 = inlined_call_operand.hbm [shape: f32[8,8,32], index: 1, kind: input, shape index: {}]
  %s2 = inlined_call_operand.hbm [shape: f32[8,8,32], index: 2, kind: input, shape index: {}]
  %s3 = inlined_call_operand.hbm [shape: f32[8,8,32], index: 3, kind: output, shape index: {}]
  %s4 = sld [smem:[#allocation0]]
  $region42: #{tpu_custom_call.1} parent=0
    _
  %s6 = ssub.s32 1, %s4
  %s7 = scalar_select 0, %s6, %s4
  $region1: #{tpu_custom_call.1} parent=0
    #allocation5 [shape = 'u8[32768]{0}', space=vmem, size = 0x8000, scoped, tag = 'input window, operand 0, single buffered']
    #allocation6 [shape = 's32[1]{0}', space=sflag, size = 0x4, scoped, tag = 'scoped memory for tpu_custom_call.1']
    #allocation7 [shape = 's32[1]{0}', space=sflag, size = 0x4, scoped, tag = 'scoped memory for tpu_custom_call.1']
    #allocation8 [shape = 'u8[32768]{0}', space=vmem, size = 0x8000, scoped, tag = 'input window, operand 1, single buffered']
    #allocation9 [shape = 's32[1]{0}', space=sflag, size = 0x4, scoped, tag = 'scoped memory for tpu_custom_call.1']
    #allocation10 [shape = 'u8[32768]{0}', space=vmem, size = 0x8000, scoped, tag = 'input window, operand 2, single buffered']
    #allocation11 [shape = 'u8[32768]{0}', space=vmem, size = 0x8000, scoped, tag = 'output window, operand 0, single buffered']
    %8 = vsyncpa [#allocation6], 0
    %9 = vsyncpa [#allocation9], 0
    %10 = vsyncpa [#allocation7], 0
    // Predicated region
    $region2: #{tpu_custom_call.1} parent=1 // pred_check
      _
    $region3: #{tpu_custom_call.1} parent=1 // pred_check_branch
      %12 = sbr.rel (0) target = $region5
    $region4: #{tpu_custom_call.1} parent=1 // pred_region
      %s14 = ssub.s32 1024, 1024
      %15 = vsyncadd [#allocation6], %s14
      %s16 = sshll.u32 [#allocation5], 4
      %s17 = int_to_ptr.vmem [resolvable:$true] %s16
      %22 = dma.hbm_to_vmem [thread:$0]  %s0, 1024, %s17, [#allocation6], 128, 128, 8
    $region5: #{tpu_custom_call.1} parent=1 // pred_fallthru
      _
    // Predicated region
    $region6: #{tpu_custom_call.1} parent=1 // pred_check
      _
    $region7: #{tpu_custom_call.1} parent=1 // pred_check_branch
      %24 = sbr.rel (0) target = $region9
    $region8: #{tpu_custom_call.1} parent=1 // pred_region
      %s26 = ssub.s32 1024, 1024
      %27 = vsyncadd [#allocation9], %s26
      %s28 = sshll.u32 [#allocation8], 4
      %s29 = int_to_ptr.vmem [resolvable:$true] %s28
      %34 = dma.hbm_to_vmem [thread:$0]  %s1, 1024, %s29, [#allocation9], 128, 128, 8
    $region9: #{tpu_custom_call.1} parent=1 // pred_fallthru
      _
    // Predicated region
    $region10: #{tpu_custom_call.1} parent=1 // pred_check
      _
    $region11: #{tpu_custom_call.1} parent=1 // pred_check_branch
      %36 = sbr.rel (0) target = $region13
    $region12: #{tpu_custom_call.1} parent=1 // pred_region
      %s38 = ssub.s32 1024, 1024
      %39 = vsyncadd [#allocation9], %s38
      %s40 = sshll.u32 [#allocation10], 4
      %s41 = int_to_ptr.vmem [resolvable:$true] %s40
      %46 = dma.hbm_to_vmem [thread:$0]  %s2, 1024, %s41, [#allocation9], 128, 128, 8
    $region13: #{tpu_custom_call.1} parent=1 // pred_fallthru
      _
    // Predicated region
    $region14: #{tpu_custom_call.1} parent=1 // pred_check
      _
    $region15: #{tpu_custom_call.1} parent=1 // pred_check_branch
      %48 = sbr.rel (0) target = $region17
    $region16: #{tpu_custom_call.1} parent=1 // pred_region
      %49 = dma.done [#allocation6], 1024
    $region17: #{tpu_custom_call.1} parent=1 // pred_fallthru
      _
    // Predicated region
    $region18: #{tpu_custom_call.1} parent=1 // pred_check
      _
    $region19: #{tpu_custom_call.1} parent=1 // pred_check_branch
      %51 = sbr.rel (0) target = $region21
    $region20: #{tpu_custom_call.1} parent=1 // pred_region
      %52 = dma.done [#allocation9], 1024
    $region21: #{tpu_custom_call.1} parent=1 // pred_fallthru
      _
    // Predicated region
    $region22: #{tpu_custom_call.1} parent=1 // pred_check
      _
    $region23: #{tpu_custom_call.1} parent=1 // pred_check_branch
      %54 = sbr.rel (0) target = $region25
    $region24: #{tpu_custom_call.1} parent=1 // pred_region
      %55 = dma.done [#allocation9], 1024
    $region25: #{tpu_custom_call.1} parent=1 // pred_fallthru
      _
    %p56 = scmp.eq.s32.totalorder 0, 0
    // Predicated region
    $region26: #{tpu_custom_call.1} parent=1 // pred_check
      %p57 = pneg %p56
    $region27: #{tpu_custom_call.1} parent=1 // pred_check_branch
      %59 = sbr.rel (%p57) target = $region29
    $region28: #{tpu_custom_call.1} parent=1 // pred_region
      %vm60 = vcmask 7168
      %61 = vst.msk [vmem:[#allocation2] sm:$0xff] %vm60, -inf
      %62 = vst.msk [vmem:[#allocation2 + $0x8] sm:$0xff] %vm60, -inf
      %63 = vst.msk [vmem:[#allocation2 + $0x10] sm:$0xff] %vm60, -inf
      %64 = vst.msk [vmem:[#allocation2 + $0x18] sm:$0xff] %vm60, -inf
      %65 = vst.msk [vmem:[#allocation2 + $0x20] sm:$0xff] %vm60, -inf
      %66 = vst.msk [vmem:[#allocation2 + $0x28] sm:$0xff] %vm60, -inf
      %67 = vst.msk [vmem:[#allocation2 + $0x30] sm:$0xff] %vm60, -inf
      %68 = vst.msk [vmem:[#allocation2 + $0x38] sm:$0xff] %vm60, -inf
      %69 = vst.msk [vmem:[#allocation3] sm:$0xff] %vm60, 0.0
      %70 = vst.msk [vmem:[#allocation3 + $0x8] sm:$0xff] %vm60, 0.0
      %71 = vst.msk [vmem:[#allocation3 + $0x10] sm:$0xff] %vm60, 0.0
      %72 = vst.msk [vmem:[#allocation3 + $0x18] sm:$0xff] %vm60, 0.0
      %73 = vst.msk [vmem:[#allocation3 + $0x20] sm:$0xff] %vm60, 0.0
      %74 = vst.msk [vmem:[#allocation3 + $0x28] sm:$0xff] %vm60, 0.0
      %75 = vst.msk [vmem:[#allocation3 + $0x30] sm:$0xff] %vm60, 0.0
      %76 = vst.msk [vmem:[#allocation3 + $0x38] sm:$0xff] %vm60, 0.0
      %vm77 = vcmask 261120
      %78 = vst.msk [vmem:[#allocation4] sm:$0xff] %vm77, 0.0
      %79 = vst.msk [vmem:[#allocation4 + $0x8] sm:$0xff] %vm77, 0.0
      %80 = vst.msk [vmem:[#allocation4 + $0x10] sm:$0xff] %vm77, 0.0
      %81 = vst.msk [vmem:[#allocation4 + $0x18] sm:$0xff] %vm77, 0.0
      %82 = vst.msk [vmem:[#allocation4 + $0x20] sm:$0xff] %vm77, 0.0
      %83 = vst.msk [vmem:[#allocation4 + $0x28] sm:$0xff] %vm77, 0.0
      %84 = vst.msk [vmem:[#allocation4 + $0x30] sm:$0xff] %vm77, 0.0
      %85 = vst.msk [vmem:[#allocation4 + $0x38] sm:$0xff] %vm77, 0.0
    $region29: #{tpu_custom_call.1} parent=1 // pred_fallthru
      _
    %v86 = vld [vmem:[#allocation5] sm:$0xff]
    %v87 = vld [vmem:[#allocation5 + $0x8] sm:$0xff]
    %v88 = vld [vmem:[#allocation5 + $0x10] sm:$0xff]
    %v89 = vld [vmem:[#allocation5 + $0x18] sm:$0xff]
    %v90 = vld [vmem:[#allocation5 + $0x20] sm:$0xff]
    %v91 = vld [vmem:[#allocation5 + $0x28] sm:$0xff]
    %v92 = vld [vmem:[#allocation5 + $0x30] sm:$0xff]
    %v93 = vld [vmem:[#allocation5 + $0x38] sm:$0xff]
    %v94 = vld [vmem:[#allocation8] sm:$0xff]
    %v95 = vld [vmem:[#allocation8 + $0x8] sm:$0xff]
    %v96 = vld [vmem:[#allocation8 + $0x10] sm:$0xff]
    %v97 = vld [vmem:[#allocation8 + $0x18] sm:$0xff]
    %v98 = vld [vmem:[#allocation8 + $0x20] sm:$0xff]
    %v99 = vld [vmem:[#allocation8 + $0x28] sm:$0xff]
    %v100 = vld [vmem:[#allocation8 + $0x30] sm:$0xff]
    %v101 = vld [vmem:[#allocation8 + $0x38] sm:$0xff]
    %v102 = vld [vmem:[#allocation10] sm:$0xff]
    %v103 = vld [vmem:[#allocation10 + $0x8] sm:$0xff]
    %v104 = vld [vmem:[#allocation10 + $0x10] sm:$0xff]
    %v105 = vld [vmem:[#allocation10 + $0x18] sm:$0xff]
    %v106 = vld [vmem:[#allocation10 + $0x20] sm:$0xff]
    %v107 = vld [vmem:[#allocation10 + $0x28] sm:$0xff]
    %v108 = vld [vmem:[#allocation10 + $0x30] sm:$0xff]
    %v109 = vld [vmem:[#allocation10 + $0x38] sm:$0xff]
    %vm110 = vcmask 261120
    %v112 = vsel %vm110, %v86, 0
    %v115 = vsel %vm110, %v94, 0
    %117 = vmatprep.subr.mxu0 0.0
    %118 = vmatpush1.xpose.msra.mxu0 %v115
    %119 = vmatprep.subr.mxu0 0.0
    %120 = vmatpush1.xpose.msra.mxu0 0.0
    %121 = vmatprep.subr.mxu0 0.0
    %122 = vmatpush1.xpose.msra.mxu0 0.0
    %123 = vmatprep.subr.mxu0 0.0
    %124 = vmatpush1.xpose.msra.mxu0 0.0
    %125 = vmatprep.subr.mxu0 0.0
    %126 = vmatpush1.xpose.msra.mxu0 0.0
    %127 = vmatprep.subr.mxu0 0.0
    %128 = vmatpush1.xpose.msra.mxu0 0.0
    %129 = vmatprep.subr.mxu0 0.0
    %130 = vmatpush1.xpose.msra.mxu0 0.0
    %131 = vmatprep.subr.mxu0 0.0
    %132 = vmatpush1.xpose.msra.mxu0 0.0
    %133 = vmatprep.subr.mxu0 0.0
    %134 = vmatpush1.xpose.msra.mxu0 0.0
    %135 = vmatprep.subr.mxu0 0.0
    %136 = vmatpush1.xpose.msra.mxu0 0.0
    %137 = vmatprep.subr.mxu0 0.0
    %138 = vmatpush1.xpose.msra.mxu0 0.0
    %139 = vmatprep.subr.mxu0 0.0
    %140 = vmatpush1.xpose.msra.mxu0 0.0
    %141 = vmatprep.subr.mxu0 0.0
    %142 = vmatpush1.xpose.msra.mxu0 0.0
    %143 = vmatprep.subr.mxu0 0.0
    %144 = vmatpush1.xpose.msra.mxu0 0.0
    %145 = vmatprep.subr.mxu0 0.0
    %146 = vmatpush1.xpose.msra.mxu0 0.0
    %147 = vmatprep.subr.mxu0 0.0
    %148 = vmatpush1.xpose.msra.mxu0 0.0
    %149 = vmatprep.subr.mxu0 0.0
    %150 = vmatpush1.xpose.msra.mxu0 0.0
    %151 = vmatprep.subr.mxu0 0.0
    %152 = vmatpush1.xpose.msra.mxu0 0.0
    %153 = vmatprep.subr.mxu0 0.0
    %154 = vmatpush1.xpose.msra.mxu0 0.0
    %155 = vmatprep.subr.mxu0 0.0
    %156 = vmatpush1.xpose.msra.mxu0 0.0
    %157 = vmatprep.subr.mxu0 0.0
    %158 = vmatpush1.xpose.msra.mxu0 0.0
    %159 = vmatprep.subr.mxu0 0.0
    %160 = vmatpush1.xpose.msra.mxu0 0.0
    %161 = vmatprep.subr.mxu0 0.0
    %162 = vmatpush1.xpose.msra.mxu0 0.0
    %163 = vmatprep.subr.mxu0 0.0
    %164 = vmatpush1.xpose.msra.mxu0 0.0
    %165 = vmatprep.subr.mxu0 0.0
    %166 = vmatpush1.xpose.msra.mxu0 0.0
    %167 = vmatprep.subr.mxu0 0.0
    %168 = vmatpush1.xpose.msra.mxu0 0.0
    %169 = vmatprep.subr.mxu0 0.0
    %170 = vmatpush1.xpose.msra.mxu0 0.0
    %171 = vmatprep.subr.mxu0 0.0
    %172 = vmatpush1.xpose.msra.mxu0 0.0
    %173 = vmatprep.subr.mxu0 0.0
    %174 = vmatpush1.xpose.msra.mxu0 0.0
    %175 = vmatprep.subr.mxu0 0.0
    %176 = vmatpush1.xpose.msra.mxu0 0.0
    %177 = vmatprep.subr.mxu0 0.0
    %178 = vmatpush1.xpose.msra.mxu0 0.0
    %179 = vmatprep.subr.mxu0 0.0
    %180 = vmatpush1.xpose.msra.mxu0 0.0
    %181 = vmatprep.mubr.f32.mxu0 0.0
    %182 = vmatmul.mubr.f32.gmra.mrb[0].mxu0 %v112
    %v183 = vpop.f32.mrb[0].mxu0
    %v184 = vadd.f32 0.0, %v183
    %v185 = vpop.f32.mrb[0].mxu0
    %186 = vdwg.mxu0
    %v188 = vsel %vm110, %v87, 0
    %v191 = vsel %vm110, %v95, 0
    %193 = vmatprep.subr.mxu0 0.0
    %194 = vmatpush1.xpose.msra.mxu0 %v191
    %195 = vmatprep.subr.mxu0 0.0
    %196 = vmatpush1.xpose.msra.mxu0 0.0
    %197 = vmatprep.subr.mxu0 0.0
    %198 = vmatpush1.xpose.msra.mxu0 0.0
    %199 = vmatprep.subr.mxu0 0.0
    %200 = vmatpush1.xpose.msra.mxu0 0.0
    %201 = vmatprep.subr.mxu0 0.0
    %202 = vmatpush1.xpose.msra.mxu0 0.0
    %203 = vmatprep.subr.mxu0 0.0
    %204 = vmatpush1.xpose.msra.mxu0 0.0
    %205 = vmatprep.subr.mxu0 0.0
    %206 = vmatpush1.xpose.msra.mxu0 0.0
    %207 = vmatprep.subr.mxu0 0.0
    %208 = vmatpush1.xpose.msra.mxu0 0.0
    %209 = vmatprep.subr.mxu0 0.0
    %210 = vmatpush1.xpose.msra.mxu0 0.0
    %211 = vmatprep.subr.mxu0 0.0
    %212 = vmatpush1.xpose.msra.mxu0 0.0
    %213 = vmatprep.subr.mxu0 0.0
    %214 = vmatpush1.xpose.msra.mxu0 0.0
    %215 = vmatprep.subr.mxu0 0.0
    %216 = vmatpush1.xpose.msra.mxu0 0.0
    %217 = vmatprep.subr.mxu0 0.0
    %218 = vmatpush1.xpose.msra.mxu0 0.0
    %219 = vmatprep.subr.mxu0 0.0
    %220 = vmatpush1.xpose.msra.mxu0 0.0
    %221 = vmatprep.subr.mxu0 0.0
    %222 = vmatpush1.xpose.msra.mxu0 0.0
    %223 = vmatprep.subr.mxu0 0.0
    %224 = vmatpush1.xpose.msra.mxu0 0.0
    %225 = vmatprep.subr.mxu0 0.0
    %226 = vmatpush1.xpose.msra.mxu0 0.0
    %227 = vmatprep.subr.mxu0 0.0
    %228 = vmatpush1.xpose.msra.mxu0 0.0
    %229 = vmatprep.subr.mxu0 0.0
    %230 = vmatpush1.xpose.msra.mxu0 0.0
    %231 = vmatprep.subr.mxu0 0.0
    %232 = vmatpush1.xpose.msra.mxu0 0.0
    %233 = vmatprep.subr.mxu0 0.0
    %234 = vmatpush1.xpose.msra.mxu0 0.0
    %235 = vmatprep.subr.mxu0 0.0
    %236 = vmatpush1.xpose.msra.mxu0 0.0
    %237 = vmatprep.subr.mxu0 0.0
    %238 = vmatpush1.xpose.msra.mxu0 0.0
    %239 = vmatprep.subr.mxu0 0.0
    %240 = vmatpush1.xpose.msra.mxu0 0.0
    %241 = vmatprep.subr.mxu0 0.0
    %242 = vmatpush1.xpose.msra.mxu0 0.0
    %243 = vmatprep.subr.mxu0 0.0
    %244 = vmatpush1.xpose.msra.mxu0 0.0
    %245 = vmatprep.subr.mxu0 0.0
    %246 = vmatpush1.xpose.msra.mxu0 0.0
    %247 = vmatprep.subr.mxu0 0.0
    %248 = vmatpush1.xpose.msra.mxu0 0.0
    %249 = vmatprep.subr.mxu0 0.0
    %250 = vmatpush1.xpose.msra.mxu0 0.0
    %251 = vmatprep.subr.mxu0 0.0
    %252 = vmatpush1.xpose.msra.mxu0 0.0
    %253 = vmatprep.subr.mxu0 0.0
    %254 = vmatpush1.xpose.msra.mxu0 0.0
    %255 = vmatprep.subr.mxu0 0.0
    %256 = vmatpush1.xpose.msra.mxu0 0.0
    %257 = vmatprep.mubr.f32.mxu0 0.0
    %258 = vmatmul.mubr.f32.gmra.mrb[0].mxu0 %v188
    %v259 = vpop.f32.mrb[0].mxu0
    %v260 = vadd.f32 0.0, %v259
    %v261 = vpop.f32.mrb[0].mxu0
    %262 = vdwg.mxu0
    %v264 = vsel %vm110, %v88, 0
    %v267 = vsel %vm110, %v96, 0
    %269 = vmatprep.subr.mxu0 0.0
    %270 = vmatpush1.xpose.msra.mxu0 %v267
    %271 = vmatprep.subr.mxu0 0.0
    %272 = vmatpush1.xpose.msra.mxu0 0.0
    %273 = vmatprep.subr.mxu0 0.0
    %274 = vmatpush1.xpose.msra.mxu0 0.0
    %275 = vmatprep.subr.mxu0 0.0
    %276 = vmatpush1.xpose.msra.mxu0 0.0
    %277 = vmatprep.subr.mxu0 0.0
    %278 = vmatpush1.xpose.msra.mxu0 0.0
    %279 = vmatprep.subr.mxu0 0.0
    %280 = vmatpush1.xpose.msra.mxu0 0.0
    %281 = vmatprep.subr.mxu0 0.0
    %282 = vmatpush1.xpose.msra.mxu0 0.0
    %283 = vmatprep.subr.mxu0 0.0
    %284 = vmatpush1.xpose.msra.mxu0 0.0
    %285 = vmatprep.subr.mxu0 0.0
    %286 = vmatpush1.xpose.msra.mxu0 0.0
    %287 = vmatprep.subr.mxu0 0.0
    %288 = vmatpush1.xpose.msra.mxu0 0.0
    %289 = vmatprep.subr.mxu0 0.0
    %290 = vmatpush1.xpose.msra.mxu0 0.0
    %291 = vmatprep.subr.mxu0 0.0
    %292 = vmatpush1.xpose.msra.mxu0 0.0
    %293 = vmatprep.subr.mxu0 0.0
    %294 = vmatpush1.xpose.msra.mxu0 0.0
    %295 = vmatprep.subr.mxu0 0.0
    %296 = vmatpush1.xpose.msra.mxu0 0.0
    %297 = vmatprep.subr.mxu0 0.0
    %298 = vmatpush1.xpose.msra.mxu0 0.0
    %299 = vmatprep.subr.mxu0 0.0
    %300 = vmatpush1.xpose.msra.mxu0 0.0
    %301 = vmatprep.subr.mxu0 0.0
    %302 = vmatpush1.xpose.msra.mxu0 0.0
    %303 = vmatprep.subr.mxu0 0.0
    %304 = vmatpush1.xpose.msra.mxu0 0.0
    %305 = vmatprep.subr.mxu0 0.0
    %306 = vmatpush1.xpose.msra.mxu0 0.0
    %307 = vmatprep.subr.mxu0 0.0
    %308 = vmatpush1.xpose.msra.mxu0 0.0
    %309 = vmatprep.subr.mxu0 0.0
    %310 = vmatpush1.xpose.msra.mxu0 0.0
    %311 = vmatprep.subr.mxu0 0.0
    %312 = vmatpush1.xpose.msra.mxu0 0.0
    %313 = vmatprep.subr.mxu0 0.0
    %314 = vmatpush1.xpose.msra.mxu0 0.0
    %315 = vmatprep.subr.mxu0 0.0
    %316 = vmatpush1.xpose.msra.mxu0 0.0
    %317 = vmatprep.subr.mxu0 0.0
    %318 = vmatpush1.xpose.msra.mxu0 0.0
    %319 = vmatprep.subr.mxu0 0.0
    %320 = vmatpush1.xpose.msra.mxu0 0.0
    %321 = vmatprep.subr.mxu0 0.0
    %322 = vmatpush1.xpose.msra.mxu0 0.0
    %323 = vmatprep.subr.mxu0 0.0
    %324 = vmatpush1.xpose.msra.mxu0 0.0
    %325 = vmatprep.subr.mxu0 0.0
    %326 = vmatpush1.xpose.msra.mxu0 0.0
    %327 = vmatprep.subr.mxu0 0.0
    %328 = vmatpush1.xpose.msra.mxu0 0.0
    %329 = vmatprep.subr.mxu0 0.0
    %330 = vmatpush1.xpose.msra.mxu0 0.0
    %331 = vmatprep.subr.mxu0 0.0
    %332 = vmatpush1.xpose.msra.mxu0 0.0
    %333 = vmatprep.mubr.f32.mxu0 0.0
    %334 = vmatmul.mubr.f32.gmra.mrb[0].mxu0 %v264
    %v335 = vpop.f32.mrb[0].mxu0
    %v336 = vadd.f32 0.0, %v335
    %v337 = vpop.f32.mrb[0].mxu0
    %338 = vdwg.mxu0
    %v340 = vsel %vm110, %v89, 0
    %v343 = vsel %vm110, %v97, 0
    %345 = vmatprep.subr.mxu0 0.0
    %346 = vmatpush1.xpose.msra.mxu0 %v343
    %347 = vmatprep.subr.mxu0 0.0
    %348 = vmatpush1.xpose.msra.mxu0 0.0
    %349 = vmatprep.subr.mxu0 0.0
    %350 = vmatpush1.xpose.msra.mxu0 0.0
    %351 = vmatprep.subr.mxu0 0.0
    %352 = vmatpush1.xpose.msra.mxu0 0.0
    %353 = vmatprep.subr.mxu0 0.0
    %354 = vmatpush1.xpose.msra.mxu0 0.0
    %355 = vmatprep.subr.mxu0 0.0
    %356 = vmatpush1.xpose.msra.mxu0 0.0
    %357 = vmatprep.subr.mxu0 0.0
    %358 = vmatpush1.xpose.msra.mxu0 0.0
    %359 = vmatprep.subr.mxu0 0.0
    %360 = vmatpush1.xpose.msra.mxu0 0.0
    %361 = vmatprep.subr.mxu0 0.0
    %362 = vmatpush1.xpose.msra.mxu0 0.0
    %363 = vmatprep.subr.mxu0 0.0
    %364 = vmatpush1.xpose.msra.mxu0 0.0
    %365 = vmatprep.subr.mxu0 0.0
    %366 = vmatpush1.xpose.msra.mxu0 0.0
    %367 = vmatprep.subr.mxu0 0.0
    %368 = vmatpush1.xpose.msra.mxu0 0.0
    %369 = vmatprep.subr.mxu0 0.0
    %370 = vmatpush1.xpose.msra.mxu0 0.0
    %371 = vmatprep.subr.mxu0 0.0
    %372 = vmatpush1.xpose.msra.mxu0 0.0
    %373 = vmatprep.subr.mxu0 0.0
    %374 = vmatpush1.xpose.msra.mxu0 0.0
    %375 = vmatprep.subr.mxu0 0.0
    %376 = vmatpush1.xpose.msra.mxu0 0.0
    %377 = vmatprep.subr.mxu0 0.0
    %378 = vmatpush1.xpose.msra.mxu0 0.0
    %379 = vmatprep.subr.mxu0 0.0
    %380 = vmatpush1.xpose.msra.mxu0 0.0
    %381 = vmatprep.subr.mxu0 0.0
    %382 = vmatpush1.xpose.msra.mxu0 0.0
    %383 = vmatprep.subr.mxu0 0.0
    %384 = vmatpush1.xpose.msra.mxu0 0.0
    %385 = vmatprep.subr.mxu0 0.0
    %386 = vmatpush1.xpose.msra.mxu0 0.0
    %387 = vmatprep.subr.mxu0 0.0
    %388 = vmatpush1.xpose.msra.mxu0 0.0
    %389 = vmatprep.subr.mxu0 0.0
    %390 = vmatpush1.xpose.msra.mxu0 0.0
    %391 = vmatprep.subr.mxu0 0.0
    %392 = vmatpush1.xpose.msra.mxu0 0.0
    %393 = vmatprep.subr.mxu0 0.0
    %394 = vmatpush1.xpose.msra.mxu0 0.0
    %395 = vmatprep.subr.mxu0 0.0
    %396 = vmatpush1.xpose.msra.mxu0 0.0
    %397 = vmatprep.subr.mxu0 0.0
    %398 = vmatpush1.xpose.msra.mxu0 0.0
    %399 = vmatprep.subr.mxu0 0.0
    %400 = vmatpush1.xpose.msra.mxu0 0.0
    %401 = vmatprep.subr.mxu0 0.0
    %402 = vmatpush1.xpose.msra.mxu0 0.0
    %403 = vmatprep.subr.mxu0 0.0
    %404 = vmatpush1.xpose.msra.mxu0 0.0
    %405 = vmatprep.subr.mxu0 0.0
    %406 = vmatpush1.xpose.msra.mxu0 0.0
    %407 = vmatprep.subr.mxu0 0.0
    %408 = vmatpush1.xpose.msra.mxu0 0.0
    %409 = vmatprep.mubr.f32.mxu0 0.0
    %410 = vmatmul.mubr.f32.gmra.mrb[0].mxu0 %v340
    %v411 = vpop.f32.mrb[0].mxu0
    %v412 = vadd.f32 0.0, %v411
    %v413 = vpop.f32.mrb[0].mxu0
    %414 = vdwg.mxu0
    %v416 = vsel %vm110, %v90, 0
    %v419 = vsel %vm110, %v98, 0
    %421 = vmatprep.subr.mxu0 0.0
    %422 = vmatpush1.xpose.msra.mxu0 %v419
    %423 = vmatprep.subr.mxu0 0.0
    %424 = vmatpush1.xpose.msra.mxu0 0.0
    %425 = vmatprep.subr.mxu0 0.0
    %426 = vmatpush1.xpose.msra.mxu0 0.0
    %427 = vmatprep.subr.mxu0 0.0
    %428 = vmatpush1.xpose.msra.mxu0 0.0
    %429 = vmatprep.subr.mxu0 0.0
    %430 = vmatpush1.xpose.msra.mxu0 0.0
    %431 = vmatprep.subr.mxu0 0.0
    %432 = vmatpush1.xpose.msra.mxu0 0.0
    %433 = vmatprep.subr.mxu0 0.0
    %434 = vmatpush1.xpose.msra.mxu0 0.0
    %435 = vmatprep.subr.mxu0 0.0
    %436 = vmatpush1.xpose.msra.mxu0 0.0
    %437 = vmatprep.subr.mxu0 0.0
    %438 = vmatpush1.xpose.msra.mxu0 0.0
    %439 = vmatprep.subr.mxu0 0.0
    %440 = vmatpush1.xpose.msra.mxu0 0.0
    %441 = vmatprep.subr.mxu0 0.0
    %442 = vmatpush1.xpose.msra.mxu0 0.0
    %443 = vmatprep.subr.mxu0 0.0
    %444 = vmatpush1.xpose.msra.mxu0 0.0
    %445 = vmatprep.subr.mxu0 0.0
    %446 = vmatpush1.xpose.msra.mxu0 0.0
    %447 = vmatprep.subr.mxu0 0.0
    %448 = vmatpush1.xpose.msra.mxu0 0.0
    %449 = vmatprep.subr.mxu0 0.0
    %450 = vmatpush1.xpose.msra.mxu0 0.0
    %451 = vmatprep.subr.mxu0 0.0
    %452 = vmatpush1.xpose.msra.mxu0 0.0
    %453 = vmatprep.subr.mxu0 0.0
    %454 = vmatpush1.xpose.msra.mxu0 0.0
    %455 = vmatprep.subr.mxu0 0.0
    %456 = vmatpush1.xpose.msra.mxu0 0.0
    %457 = vmatprep.subr.mxu0 0.0
    %458 = vmatpush1.xpose.msra.mxu0 0.0
    %459 = vmatprep.subr.mxu0 0.0
    %460 = vmatpush1.xpose.msra.mxu0 0.0
    %461 = vmatprep.subr.mxu0 0.0
    %462 = vmatpush1.xpose.msra.mxu0 0.0
    %463 = vmatprep.subr.mxu0 0.0
    %464 = vmatpush1.xpose.msra.mxu0 0.0
    %465 = vmatprep.subr.mxu0 0.0
    %466 = vmatpush1.xpose.msra.mxu0 0.0
    %467 = vmatprep.subr.mxu0 0.0
    %468 = vmatpush1.xpose.msra.mxu0 0.0
    %469 = vmatprep.subr.mxu0 0.0
    %470 = vmatpush1.xpose.msra.mxu0 0.0
    %471 = vmatprep.subr.mxu0 0.0
    %472 = vmatpush1.xpose.msra.mxu0 0.0
    %473 = vmatprep.subr.mxu0 0.0
    %474 = vmatpush1.xpose.msra.mxu0 0.0
    %475 = vmatprep.subr.mxu0 0.0
    %476 = vmatpush1.xpose.msra.mxu0 0.0
    %477 = vmatprep.subr.mxu0 0.0
    %478 = vmatpush1.xpose.msra.mxu0 0.0
    %479 = vmatprep.subr.mxu0 0.0
    %480 = vmatpush1.xpose.msra.mxu0 0.0
    %481 = vmatprep.subr.mxu0 0.0
    %482 = vmatpush1.xpose.msra.mxu0 0.0
    %483 = vmatprep.subr.mxu0 0.0
    %484 = vmatpush1.xpose.msra.mxu0 0.0
    %485 = vmatprep.mubr.f32.mxu0 0.0
    %486 = vmatmul.mubr.f32.gmra.mrb[0].mxu0 %v416
    %v487 = vpop.f32.mrb[0].mxu0
    %v488 = vadd.f32 0.0, %v487
    %v489 = vpop.f32.mrb[0].mxu0
    %490 = vdwg.mxu0
    %v492 = vsel %vm110, %v91, 0
    %v495 = vsel %vm110, %v99, 0
    %497 = vmatprep.subr.mxu0 0.0
    %498 = vmatpush1.xpose.msra.mxu0 %v495
    %499 = vmatprep.subr.mxu0 0.0
    %500 = vmatpush1.xpose.msra.mxu0 0.0
    %501 = vmatprep.subr.mxu0 0.0
    %502 = vmatpush1.xpose.msra.mxu0 0.0
    %503 = vmatprep.subr.mxu0 0.0
    %504 = vmatpush1.xpose.msra.mxu0 0.0
    %505 = vmatprep.subr.mxu0 0.0
    %506 = vmatpush1.xpose.msra.mxu0 0.0
    %507 = vmatprep.subr.mxu0 0.0
    %508 = vmatpush1.xpose.msra.mxu0 0.0
    %509 = vmatprep.subr.mxu0 0.0
    %510 = vmatpush1.xpose.msra.mxu0 0.0
    %511 = vmatprep.subr.mxu0 0.0
    %512 = vmatpush1.xpose.msra.mxu0 0.0
    %513 = vmatprep.subr.mxu0 0.0
    %514 = vmatpush1.xpose.msra.mxu0 0.0
    %515 = vmatprep.subr.mxu0 0.0
    %516 = vmatpush1.xpose.msra.mxu0 0.0
    %517 = vmatprep.subr.mxu0 0.0
    %518 = vmatpush1.xpose.msra.mxu0 0.0
    %519 = vmatprep.subr.mxu0 0.0
    %520 = vmatpush1.xpose.msra.mxu0 0.0
    %521 = vmatprep.subr.mxu0 0.0
    %522 = vmatpush1.xpose.msra.mxu0 0.0
    %523 = vmatprep.subr.mxu0 0.0
    %524 = vmatpush1.xpose.msra.mxu0 0.0
    %525 = vmatprep.subr.mxu0 0.0
    %526 = vmatpush1.xpose.msra.mxu0 0.0
    %527 = vmatprep.subr.mxu0 0.0
    %528 = vmatpush1.xpose.msra.mxu0 0.0
    %529 = vmatprep.subr.mxu0 0.0
    %530 = vmatpush1.xpose.msra.mxu0 0.0
    %531 = vmatprep.subr.mxu0 0.0
    %532 = vmatpush1.xpose.msra.mxu0 0.0
    %533 = vmatprep.subr.mxu0 0.0
    %534 = vmatpush1.xpose.msra.mxu0 0.0
    %535 = vmatprep.subr.mxu0 0.0
    %536 = vmatpush1.xpose.msra.mxu0 0.0
    %537 = vmatprep.subr.mxu0 0.0
    %538 = vmatpush1.xpose.msra.mxu0 0.0
    %539 = vmatprep.subr.mxu0 0.0
    %540 = vmatpush1.xpose.msra.mxu0 0.0
    %541 = vmatprep.subr.mxu0 0.0
    %542 = vmatpush1.xpose.msra.mxu0 0.0
    %543 = vmatprep.subr.mxu0 0.0
    %544 = vmatpush1.xpose.msra.mxu0 0.0
    %545 = vmatprep.subr.mxu0 0.0
    %546 = vmatpush1.xpose.msra.mxu0 0.0
    %547 = vmatprep.subr.mxu0 0.0
    %548 = vmatpush1.xpose.msra.mxu0 0.0
    %549 = vmatprep.subr.mxu0 0.0
    %550 = vmatpush1.xpose.msra.mxu0 0.0
    %551 = vmatprep.subr.mxu0 0.0
    %552 = vmatpush1.xpose.msra.mxu0 0.0
    %553 = vmatprep.subr.mxu0 0.0
    %554 = vmatpush1.xpose.msra.mxu0 0.0
    %555 = vmatprep.subr.mxu0 0.0
    %556 = vmatpush1.xpose.msra.mxu0 0.0
    %557 = vmatprep.subr.mxu0 0.0
    %558 = vmatpush1.xpose.msra.mxu0 0.0
    %559 = vmatprep.subr.mxu0 0.0
    %560 = vmatpush1.xpose.msra.mxu0 0.0
    %561 = vmatprep.mubr.f32.mxu0 0.0
    %562 = vmatmul.mubr.f32.gmra.mrb[0].mxu0 %v492
    %v563 = vpop.f32.mrb[0].mxu0
    %v564 = vadd.f32 0.0, %v563
    %v565 = vpop.f32.mrb[0].mxu0
    %566 = vdwg.mxu0
    %v568 = vsel %vm110, %v92, 0
    %v571 = vsel %vm110, %v100, 0
    %573 = vmatprep.subr.mxu0 0.0
    %574 = vmatpush1.xpose.msra.mxu0 %v571
    %575 = vmatprep.subr.mxu0 0.0
    %576 = vmatpush1.xpose.msra.mxu0 0.0
    %577 = vmatprep.subr.mxu0 0.0
    %578 = vmatpush1.xpose.msra.mxu0 0.0
    %579 = vmatprep.subr.mxu0 0.0
    %580 = vmatpush1.xpose.msra.mxu0 0.0
    %581 = vmatprep.subr.mxu0 0.0
    %582 = vmatpush1.xpose.msra.mxu0 0.0
    %583 = vmatprep.subr.mxu0 0.0
    %584 = vmatpush1.xpose.msra.mxu0 0.0
    %585 = vmatprep.subr.mxu0 0.0
    %586 = vmatpush1.xpose.msra.mxu0 0.0
    %587 = vmatprep.subr.mxu0 0.0
    %588 = vmatpush1.xpose.msra.mxu0 0.0
    %589 = vmatprep.subr.mxu0 0.0
    %590 = vmatpush1.xpose.msra.mxu0 0.0
    %591 = vmatprep.subr.mxu0 0.0
    %592 = vmatpush1.xpose.msra.mxu0 0.0
    %593 = vmatprep.subr.mxu0 0.0
    %594 = vmatpush1.xpose.msra.mxu0 0.0
    %595 = vmatprep.subr.mxu0 0.0
    %596 = vmatpush1.xpose.msra.mxu0 0.0
    %597 = vmatprep.subr.mxu0 0.0
    %598 = vmatpush1.xpose.msra.mxu0 0.0
    %599 = vmatprep.subr.mxu0 0.0
    %600 = vmatpush1.xpose.msra.mxu0 0.0
    %601 = vmatprep.subr.mxu0 0.0
    %602 = vmatpush1.xpose.msra.mxu0 0.0
    %603 = vmatprep.subr.mxu0 0.0
    %604 = vmatpush1.xpose.msra.mxu0 0.0
    %605 = vmatprep.subr.mxu0 0.0
    %606 = vmatpush1.xpose.msra.mxu0 0.0
    %607 = vmatprep.subr.mxu0 0.0
    %608 = vmatpush1.xpose.msra.mxu0 0.0
    %609 = vmatprep.subr.mxu0 0.0
    %610 = vmatpush1.xpose.msra.mxu0 0.0
    %611 = vmatprep.subr.mxu0 0.0
    %612 = vmatpush1.xpose.msra.mxu0 0.0
    %613 = vmatprep.subr.mxu0 0.0
    %614 = vmatpush1.xpose.msra.mxu0 0.0
    %615 = vmatprep.subr.mxu0 0.0
    %616 = vmatpush1.xpose.msra.mxu0 0.0
    %617 = vmatprep.subr.mxu0 0.0
    %618 = vmatpush1.xpose.msra.mxu0 0.0
    %619 = vmatprep.subr.mxu0 0.0
    %620 = vmatpush1.xpose.msra.mxu0 0.0
    %621 = vmatprep.subr.mxu0 0.0
    %622 = vmatpush1.xpose.msra.mxu0 0.0
    %623 = vmatprep.subr.mxu0 0.0
    %624 = vmatpush1.xpose.msra.mxu0 0.0
    %625 = vmatprep.subr.mxu0 0.0
    %626 = vmatpush1.xpose.msra.mxu0 0.0
    %627 = vmatprep.subr.mxu0 0.0
    %628 = vmatpush1.xpose.msra.mxu0 0.0
    %629 = vmatprep.subr.mxu0 0.0
    %630 = vmatpush1.xpose.msra.mxu0 0.0
    %631 = vmatprep.subr.mxu0 0.0
    %632 = vmatpush1.xpose.msra.mxu0 0.0
    %633 = vmatprep.subr.mxu0 0.0
    %634 = vmatpush1.xpose.msra.mxu0 0.0
    %635 = vmatprep.subr.mxu0 0.0
    %636 = vmatpush1.xpose.msra.mxu0 0.0
    %637 = vmatprep.mubr.f32.mxu0 0.0
    %638 = vmatmul.mubr.f32.gmra.mrb[0].mxu0 %v568
    %v639 = vpop.f32.mrb[0].mxu0
    %v640 = vadd.f32 0.0, %v639
    %v641 = vpop.f32.mrb[0].mxu0
    %642 = vdwg.mxu0
    %v644 = vsel %vm110, %v93, 0
    %v647 = vsel %vm110, %v101, 0
    %649 = vmatprep.subr.mxu0 0.0
    %650 = vmatpush1.xpose.msra.mxu0 %v647
    %651 = vmatprep.subr.mxu0 0.0
    %652 = vmatpush1.xpose.msra.mxu0 0.0
    %653 = vmatprep.subr.mxu0 0.0
    %654 = vmatpush1.xpose.msra.mxu0 0.0
    %655 = vmatprep.subr.mxu0 0.0
    %656 = vmatpush1.xpose.msra.mxu0 0.0
    %657 = vmatprep.subr.mxu0 0.0
    %658 = vmatpush1.xpose.msra.mxu0 0.0
    %659 = vmatprep.subr.mxu0 0.0
    %660 = vmatpush1.xpose.msra.mxu0 0.0
    %661 = vmatprep.subr.mxu0 0.0
    %662 = vmatpush1.xpose.msra.mxu0 0.0
    %663 = vmatprep.subr.mxu0 0.0
    %664 = vmatpush1.xpose.msra.mxu0 0.0
    %665 = vmatprep.subr.mxu0 0.0
    %666 = vmatpush1.xpose.msra.mxu0 0.0
    %667 = vmatprep.subr.mxu0 0.0
    %668 = vmatpush1.xpose.msra.mxu0 0.0
    %669 = vmatprep.subr.mxu0 0.0
    %670 = vmatpush1.xpose.msra.mxu0 0.0
    %671 = vmatprep.subr.mxu0 0.0
    %672 = vmatpush1.xpose.msra.mxu0 0.0
    %673 = vmatprep.subr.mxu0 0.0
    %674 = vmatpush1.xpose.msra.mxu0 0.0
    %675 = vmatprep.subr.mxu0 0.0
    %676 = vmatpush1.xpose.msra.mxu0 0.0
    %677 = vmatprep.subr.mxu0 0.0
    %678 = vmatpush1.xpose.msra.mxu0 0.0
    %679 = vmatprep.subr.mxu0 0.0
    %680 = vmatpush1.xpose.msra.mxu0 0.0
    %681 = vmatprep.subr.mxu0 0.0
    %682 = vmatpush1.xpose.msra.mxu0 0.0
    %683 = vmatprep.subr.mxu0 0.0
    %684 = vmatpush1.xpose.msra.mxu0 0.0
    %685 = vmatprep.subr.mxu0 0.0
    %686 = vmatpush1.xpose.msra.mxu0 0.0
    %687 = vmatprep.subr.mxu0 0.0
    %688 = vmatpush1.xpose.msra.mxu0 0.0
    %689 = vmatprep.subr.mxu0 0.0
    %690 = vmatpush1.xpose.msra.mxu0 0.0
    %691 = vmatprep.subr.mxu0 0.0
    %692 = vmatpush1.xpose.msra.mxu0 0.0
    %693 = vmatprep.subr.mxu0 0.0
    %694 = vmatpush1.xpose.msra.mxu0 0.0
    %695 = vmatprep.subr.mxu0 0.0
    %696 = vmatpush1.xpose.msra.mxu0 0.0
    %697 = vmatprep.subr.mxu0 0.0
    %698 = vmatpush1.xpose.msra.mxu0 0.0
    %699 = vmatprep.subr.mxu0 0.0
    %700 = vmatpush1.xpose.msra.mxu0 0.0
    %701 = vmatprep.subr.mxu0 0.0
    %702 = vmatpush1.xpose.msra.mxu0 0.0
    %703 = vmatprep.subr.mxu0 0.0
    %704 = vmatpush1.xpose.msra.mxu0 0.0
    %705 = vmatprep.subr.mxu0 0.0
    %706 = vmatpush1.xpose.msra.mxu0 0.0
    %707 = vmatprep.subr.mxu0 0.0
    %708 = vmatpush1.xpose.msra.mxu0 0.0
    %709 = vmatprep.subr.mxu0 0.0
    %710 = vmatpush1.xpose.msra.mxu0 0.0
    %711 = vmatprep.subr.mxu0 0.0
    %712 = vmatpush1.xpose.msra.mxu0 0.0
    %713 = vmatprep.mubr.f32.mxu0 0.0
    %714 = vmatmul.mubr.f32.gmra.mrb[0].mxu0 %v644
    %v715 = vpop.f32.mrb[0].mxu0
    %v716 = vadd.f32 0.0, %v715
    %v717 = vpop.f32.mrb[0].mxu0
    %718 = vdwg.mxu0
    %v719 = vmul.f32 %v184, 0.17677669
    %v720 = vmul.f32 %v260, 0.17677669
    %v721 = vmul.f32 %v336, 0.17677669
    %v722 = vmul.f32 %v412, 0.17677669
    %v723 = vmul.f32 %v488, 0.17677669
    %v724 = vmul.f32 %v564, 0.17677669
    %v725 = vmul.f32 %v640, 0.17677669
    %v726 = vmul.f32 %v716, 0.17677669
    %v727 = vld [vmem:[#allocation2] sm:$0xff]
    %v728 = vld [vmem:[#allocation2 + $0x8] sm:$0xff]
    %v729 = vld [vmem:[#allocation2 + $0x10] sm:$0xff]
    %v730 = vld [vmem:[#allocation2 + $0x18] sm:$0xff]
    %v731 = vld [vmem:[#allocation2 + $0x20] sm:$0xff]
    %v732 = vld [vmem:[#allocation2 + $0x28] sm:$0xff]
    %v733 = vld [vmem:[#allocation2 + $0x30] sm:$0xff]
    %v734 = vld [vmem:[#allocation2 + $0x38] sm:$0xff]
    %vm735 = vcmask 64512
    %v736 = vsel %vm735, %v719, -inf
    %737 = vmax.xlane.f32.xlu0 %v736
    %v738 = vpop.xlane.xlu0 %737
    %v739 = vsel %vm735, %v720, -inf
    %740 = vmax.xlane.f32.xlu0 %v739
    %v741 = vpop.xlane.xlu0 %740
    %v742 = vsel %vm735, %v721, -inf
    %743 = vmax.xlane.f32.xlu0 %v742
    %v744 = vpop.xlane.xlu0 %743
    %v745 = vsel %vm735, %v722, -inf
    %746 = vmax.xlane.f32.xlu0 %v745
    %v747 = vpop.xlane.xlu0 %746
    %v748 = vsel %vm735, %v723, -inf
    %749 = vmax.xlane.f32.xlu0 %v748
    %v750 = vpop.xlane.xlu0 %749
    %v751 = vsel %vm735, %v724, -inf
    %752 = vmax.xlane.f32.xlu0 %v751
    %v753 = vpop.xlane.xlu0 %752
    %v754 = vsel %vm735, %v725, -inf
    %755 = vmax.xlane.f32.xlu0 %v754
    %v756 = vpop.xlane.xlu0 %755
    %v757 = vsel %vm735, %v726, -inf
    %758 = vmax.xlane.f32.xlu0 %v757
    %v759 = vpop.xlane.xlu0 %758
    %v760 = vmax.f32 %v727, %v738
    %v761 = vmax.f32 %v728, %v741
    %v762 = vmax.f32 %v729, %v744
    %v763 = vmax.f32 %v730, %v747
    %v764 = vmax.f32 %v731, %v750
    %v765 = vmax.f32 %v732, %v753
    %v766 = vmax.f32 %v733, %v756
    %v767 = vmax.f32 %v734, %v759
    %v768 = vsub.f32 %v727, %v760
    %v769 = vsub.f32 %v728, %v761
    %v770 = vsub.f32 %v729, %v762
    %v771 = vsub.f32 %v730, %v763
    %v772 = vsub.f32 %v731, %v764
    %v773 = vsub.f32 %v732, %v765
    %v774 = vsub.f32 %v733, %v766
    %v775 = vsub.f32 %v734, %v767
    %v776 = vmul.f32 %v768, 1.442695
    %v777 = vpow.pop %v776
    %v778 = vmul.f32 %v769, 1.442695
    %v779 = vpow.pop %v778
    %v780 = vmul.f32 %v770, 1.442695
    %v781 = vpow.pop %v780
    %v782 = vmul.f32 %v771, 1.442695
    %v783 = vpow.pop %v782
    %v784 = vmul.f32 %v772, 1.442695
    %v785 = vpow.pop %v784
    %v786 = vmul.f32 %v773, 1.442695
    %v787 = vpow.pop %v786
    %v788 = vmul.f32 %v774, 1.442695
    %v789 = vpow.pop %v788
    %v790 = vmul.f32 %v775, 1.442695
    %v791 = vpow.pop %v790
    %793 = vset.pattern.permute.xlu0 0
    %794 = vperm.xlu0 %793, %v760
    %v795 = vpop.permute.xlu0 %794
    %798 = vset.pattern.permute.xlu0 0
    %799 = vperm.xlu0 %798, %v761
    %v800 = vpop.permute.xlu0 %799
    %803 = vset.pattern.permute.xlu0 0
    %804 = vperm.xlu0 %803, %v762
    %v805 = vpop.permute.xlu0 %804
    %808 = vset.pattern.permute.xlu0 0
    %809 = vperm.xlu0 %808, %v763
    %v810 = vpop.permute.xlu0 %809
    %813 = vset.pattern.permute.xlu0 0
    %814 = vperm.xlu0 %813, %v764
    %v815 = vpop.permute.xlu0 %814
    %818 = vset.pattern.permute.xlu0 0
    %819 = vperm.xlu0 %818, %v765
    %v820 = vpop.permute.xlu0 %819
    %823 = vset.pattern.permute.xlu0 0
    %824 = vperm.xlu0 %823, %v766
    %v825 = vpop.permute.xlu0 %824
    %828 = vset.pattern.permute.xlu0 0
    %829 = vperm.xlu0 %828, %v767
    %v830 = vpop.permute.xlu0 %829
    %v832 = vsub.f32 %v719, %v795
    %v833 = vsub.f32 %v720, %v800
    %v834 = vsub.f32 %v721, %v805
    %v835 = vsub.f32 %v722, %v810
    %v836 = vsub.f32 %v723, %v815
    %v837 = vsub.f32 %v724, %v820
    %v838 = vsub.f32 %v725, %v825
    %v839 = vsub.f32 %v726, %v830
    %v840 = vmul.f32 %v832, 1.442695
    %v841 = vpow.pop %v840
    %v842 = vmul.f32 %v833, 1.442695
    %v843 = vpow.pop %v842
    %v844 = vmul.f32 %v834, 1.442695
    %v845 = vpow.pop %v844
    %v846 = vmul.f32 %v835, 1.442695
    %v847 = vpow.pop %v846
    %v848 = vmul.f32 %v836, 1.442695
    %v849 = vpow.pop %v848
    %v850 = vmul.f32 %v837, 1.442695
    %v851 = vpow.pop %v850
    %v852 = vmul.f32 %v838, 1.442695
    %v853 = vpow.pop %v852
    %v854 = vmul.f32 %v839, 1.442695
    %v855 = vpow.pop %v854
    %v856 = vld [vmem:[#allocation3] sm:$0xff]
    %v857 = vld [vmem:[#allocation3 + $0x8] sm:$0xff]
    %v858 = vld [vmem:[#allocation3 + $0x10] sm:$0xff]
    %v859 = vld [vmem:[#allocation3 + $0x18] sm:$0xff]
    %v860 = vld [vmem:[#allocation3 + $0x20] sm:$0xff]
    %v861 = vld [vmem:[#allocation3 + $0x28] sm:$0xff]
    %v862 = vld [vmem:[#allocation3 + $0x30] sm:$0xff]
    %v863 = vld [vmem:[#allocation3 + $0x38] sm:$0xff]
    %v864 = vmul.f32 %v777, %v856
    %v865 = vmul.f32 %v779, %v857
    %v866 = vmul.f32 %v781, %v858
    %v867 = vmul.f32 %v783, %v859
    %v868 = vmul.f32 %v785, %v860
    %v869 = vmul.f32 %v787, %v861
    %v870 = vmul.f32 %v789, %v862
    %v871 = vmul.f32 %v791, %v863
    %v872 = vsel %vm735, %v841, 0.0
    %873 = vadd.xlane.f32.xlu0 %v872
    %v874 = vpop.xlane.xlu0 %873
    %v875 = vsel %vm735, %v843, 0.0
    %876 = vadd.xlane.f32.xlu0 %v875
    %v877 = vpop.xlane.xlu0 %876
    %v878 = vsel %vm735, %v845, 0.0
    %879 = vadd.xlane.f32.xlu0 %v878
    %v880 = vpop.xlane.xlu0 %879
    %v881 = vsel %vm735, %v847, 0.0
    %882 = vadd.xlane.f32.xlu0 %v881
    %v883 = vpop.xlane.xlu0 %882
    %v884 = vsel %vm735, %v849, 0.0
    %885 = vadd.xlane.f32.xlu0 %v884
    %v886 = vpop.xlane.xlu0 %885
    %v887 = vsel %vm735, %v851, 0.0
    %888 = vadd.xlane.f32.xlu0 %v887
    %v889 = vpop.xlane.xlu0 %888
    %v890 = vsel %vm735, %v853, 0.0
    %891 = vadd.xlane.f32.xlu0 %v890
    %v892 = vpop.xlane.xlu0 %891
    %v893 = vsel %vm735, %v855, 0.0
    %894 = vadd.xlane.f32.xlu0 %v893
    %v895 = vpop.xlane.xlu0 %894
    %v896 = vadd.f32 %v864, %v874
    %v897 = vadd.f32 %v865, %v877
    %v898 = vadd.f32 %v866, %v880
    %v899 = vadd.f32 %v867, %v883
    %v900 = vadd.f32 %v868, %v886
    %v901 = vadd.f32 %v869, %v889
    %v902 = vadd.f32 %v870, %v892
    %v903 = vadd.f32 %v871, %v895
    %vm904 = vcmask 7168
    %905 = vst.msk [vmem:[#allocation3] sm:$0xff] %vm904, %v896
    %906 = vst.msk [vmem:[#allocation3 + $0x8] sm:$0xff] %vm904, %v897
    %907 = vst.msk [vmem:[#allocation3 + $0x10] sm:$0xff] %vm904, %v898
    %908 = vst.msk [vmem:[#allocation3 + $0x18] sm:$0xff] %vm904, %v899
    %909 = vst.msk [vmem:[#allocation3 + $0x20] sm:$0xff] %vm904, %v900
    %910 = vst.msk [vmem:[#allocation3 + $0x28] sm:$0xff] %vm904, %v901
    %911 = vst.msk [vmem:[#allocation3 + $0x30] sm:$0xff] %vm904, %v902
    %912 = vst.msk [vmem:[#allocation3 + $0x38] sm:$0xff] %vm904, %v903
    %v913 = vld [vmem:[#allocation4] sm:$0xff]
    %v914 = vld [vmem:[#allocation4 + $0x8] sm:$0xff]
    %v915 = vld [vmem:[#allocation4 + $0x10] sm:$0xff]
    %v916 = vld [vmem:[#allocation4 + $0x18] sm:$0xff]
    %v917 = vld [vmem:[#allocation4 + $0x20] sm:$0xff]
    %v918 = vld [vmem:[#allocation4 + $0x28] sm:$0xff]
    %v919 = vld [vmem:[#allocation4 + $0x30] sm:$0xff]
    %v920 = vld [vmem:[#allocation4 + $0x38] sm:$0xff]
    %922 = vset.pattern.permute.xlu0 0
    %923 = vperm.xlu0 %922, %v777
    %v924 = vpop.permute.xlu0 %923
    %927 = vset.pattern.permute.xlu0 0
    %928 = vperm.xlu0 %927, %v779
    %v929 = vpop.permute.xlu0 %928
    %932 = vset.pattern.permute.xlu0 0
    %933 = vperm.xlu0 %932, %v781
    %v934 = vpop.permute.xlu0 %933
    %937 = vset.pattern.permute.xlu0 0
    %938 = vperm.xlu0 %937, %v783
    %v939 = vpop.permute.xlu0 %938
    %942 = vset.pattern.permute.xlu0 0
    %943 = vperm.xlu0 %942, %v785
    %v944 = vpop.permute.xlu0 %943
    %947 = vset.pattern.permute.xlu0 0
    %948 = vperm.xlu0 %947, %v787
    %v949 = vpop.permute.xlu0 %948
    %952 = vset.pattern.permute.xlu0 0
    %953 = vperm.xlu0 %952, %v789
    %v954 = vpop.permute.xlu0 %953
    %957 = vset.pattern.permute.xlu0 0
    %958 = vperm.xlu0 %957, %v791
    %v959 = vpop.permute.xlu0 %958
    %v961 = vmul.f32 %v924, %v913
    %v962 = vmul.f32 %v929, %v914
    %v963 = vmul.f32 %v934, %v915
    %v964 = vmul.f32 %v939, %v916
    %v965 = vmul.f32 %v944, %v917
    %v966 = vmul.f32 %v949, %v918
    %v967 = vmul.f32 %v954, %v919
    %v968 = vmul.f32 %v959, %v920
    %v970 = vsel %vm735, %v841, 0
    %972 = vmatprep.subr.mxu0 0.0
    %973 = vmatpush1.msra.mxu0 %v102
    %974 = vmatprep.subr.mxu0 0.0
    %975 = vmatpush1.msra.mxu0 0.0
    %976 = vmatprep.subr.mxu0 0.0
    %977 = vmatpush1.msra.mxu0 0.0
    %978 = vmatprep.subr.mxu0 0.0
    %979 = vmatpush1.msra.mxu0 0.0
    %980 = vmatprep.subr.mxu0 0.0
    %981 = vmatpush1.msra.mxu0 0.0
    %982 = vmatprep.subr.mxu0 0.0
    %983 = vmatpush1.msra.mxu0 0.0
    %984 = vmatprep.subr.mxu0 0.0
    %985 = vmatpush1.msra.mxu0 0.0
    %986 = vmatprep.subr.mxu0 0.0
    %987 = vmatpush1.msra.mxu0 0.0
    %988 = vmatprep.subr.mxu0 0.0
    %989 = vmatpush1.msra.mxu0 0.0
    %990 = vmatprep.subr.mxu0 0.0
    %991 = vmatpush1.msra.mxu0 0.0
    %992 = vmatprep.subr.mxu0 0.0
    %993 = vmatpush1.msra.mxu0 0.0
    %994 = vmatprep.subr.mxu0 0.0
    %995 = vmatpush1.msra.mxu0 0.0
    %996 = vmatprep.subr.mxu0 0.0
    %997 = vmatpush1.msra.mxu0 0.0
    %998 = vmatprep.subr.mxu0 0.0
    %999 = vmatpush1.msra.mxu0 0.0
    %1000 = vmatprep.subr.mxu0 0.0
    %1001 = vmatpush1.msra.mxu0 0.0
    %1002 = vmatprep.subr.mxu0 0.0
    %1003 = vmatpush1.msra.mxu0 0.0
    %1004 = vmatprep.subr.mxu0 0.0
    %1005 = vmatpush1.msra.mxu0 0.0
    %1006 = vmatprep.subr.mxu0 0.0
    %1007 = vmatpush1.msra.mxu0 0.0
    %1008 = vmatprep.subr.mxu0 0.0
    %1009 = vmatpush1.msra.mxu0 0.0
    %1010 = vmatprep.subr.mxu0 0.0
    %1011 = vmatpush1.msra.mxu0 0.0
    %1012 = vmatprep.subr.mxu0 0.0
    %1013 = vmatpush1.msra.mxu0 0.0
    %1014 = vmatprep.subr.mxu0 0.0
    %1015 = vmatpush1.msra.mxu0 0.0
    %1016 = vmatprep.subr.mxu0 0.0
    %1017 = vmatpush1.msra.mxu0 0.0
    %1018 = vmatprep.subr.mxu0 0.0
    %1019 = vmatpush1.msra.mxu0 0.0
    %1020 = vmatprep.subr.mxu0 0.0
    %1021 = vmatpush1.msra.mxu0 0.0
    %1022 = vmatprep.subr.mxu0 0.0
    %1023 = vmatpush1.msra.mxu0 0.0
    %1024 = vmatprep.subr.mxu0 0.0
    %1025 = vmatpush1.msra.mxu0 0.0
    %1026 = vmatprep.subr.mxu0 0.0
    %1027 = vmatpush1.msra.mxu0 0.0
    %1028 = vmatprep.subr.mxu0 0.0
    %1029 = vmatpush1.msra.mxu0 0.0
    %1030 = vmatprep.subr.mxu0 0.0
    %1031 = vmatpush1.msra.mxu0 0.0
    %1032 = vmatprep.subr.mxu0 0.0
    %1033 = vmatpush1.msra.mxu0 0.0
    %1034 = vmatprep.subr.mxu0 0.0
    %1035 = vmatpush1.msra.mxu0 0.0
    %1036 = vmatprep.mubr.f32.mxu0 0.0
    %1037 = vmatmul.mubr.f32.gmra.mrb[0].mxu0 %v970
    %v1038 = vpop.f32.mrb[0].mxu0
    %v1039 = vadd.f32 0.0, %v1038
    %v1040 = vpop.f32.mrb[0].mxu0
    %1041 = vdwg.mxu0
    %v1043 = vsel %vm735, %v843, 0
    %1045 = vmatprep.subr.mxu0 0.0
    %1046 = vmatpush1.msra.mxu0 %v103
    %1047 = vmatprep.subr.mxu0 0.0
    %1048 = vmatpush1.msra.mxu0 0.0
    %1049 = vmatprep.subr.mxu0 0.0
    %1050 = vmatpush1.msra.mxu0 0.0
    %1051 = vmatprep.subr.mxu0 0.0
    %1052 = vmatpush1.msra.mxu0 0.0
    %1053 = vmatprep.subr.mxu0 0.0
    %1054 = vmatpush1.msra.mxu0 0.0
    %1055 = vmatprep.subr.mxu0 0.0
    %1056 = vmatpush1.msra.mxu0 0.0
    %1057 = vmatprep.subr.mxu0 0.0
    %1058 = vmatpush1.msra.mxu0 0.0
    %1059 = vmatprep.subr.mxu0 0.0
    %1060 = vmatpush1.msra.mxu0 0.0
    %1061 = vmatprep.subr.mxu0 0.0
    %1062 = vmatpush1.msra.mxu0 0.0
    %1063 = vmatprep.subr.mxu0 0.0
    %1064 = vmatpush1.msra.mxu0 0.0
    %1065 = vmatprep.subr.mxu0 0.0
    %1066 = vmatpush1.msra.mxu0 0.0
    %1067 = vmatprep.subr.mxu0 0.0
    %1068 = vmatpush1.msra.mxu0 0.0
    %1069 = vmatprep.subr.mxu0 0.0
    %1070 = vmatpush1.msra.mxu0 0.0
    %1071 = vmatprep.subr.mxu0 0.0
    %1072 = vmatpush1.msra.mxu0 0.0
    %1073 = vmatprep.subr.mxu0 0.0
    %1074 = vmatpush1.msra.mxu0 0.0
    %1075 = vmatprep.subr.mxu0 0.0
    %1076 = vmatpush1.msra.mxu0 0.0
    %1077 = vmatprep.subr.mxu0 0.0
    %1078 = vmatpush1.msra.mxu0 0.0
    %1079 = vmatprep.subr.mxu0 0.0
    %1080 = vmatpush1.msra.mxu0 0.0
    %1081 = vmatprep.subr.mxu0 0.0
    %1082 = vmatpush1.msra.mxu0 0.0
    %1083 = vmatprep.subr.mxu0 0.0
    %1084 = vmatpush1.msra.mxu0 0.0
    %1085 = vmatprep.subr.mxu0 0.0
    %1086 = vmatpush1.msra.mxu0 0.0
    %1087 = vmatprep.subr.mxu0 0.0
    %1088 = vmatpush1.msra.mxu0 0.0
    %1089 = vmatprep.subr.mxu0 0.0
    %1090 = vmatpush1.msra.mxu0 0.0
    %1091 = vmatprep.subr.mxu0 0.0
    %1092 = vmatpush1.msra.mxu0 0.0
    %1093 = vmatprep.subr.mxu0 0.0
    %1094 = vmatpush1.msra.mxu0 0.0
    %1095 = vmatprep.subr.mxu0 0.0
    %1096 = vmatpush1.msra.mxu0 0.0
    %1097 = vmatprep.subr.mxu0 0.0
    %1098 = vmatpush1.msra.mxu0 0.0
    %1099 = vmatprep.subr.mxu0 0.0
    %1100 = vmatpush1.msra.mxu0 0.0
    %1101 = vmatprep.subr.mxu0 0.0
    %1102 = vmatpush1.msra.mxu0 0.0
    %1103 = vmatprep.subr.mxu0 0.0
    %1104 = vmatpush1.msra.mxu0 0.0
    %1105 = vmatprep.subr.mxu0 0.0
    %1106 = vmatpush1.msra.mxu0 0.0
    %1107 = vmatprep.subr.mxu0 0.0
    %1108 = vmatpush1.msra.mxu0 0.0
    %1109 = vmatprep.mubr.f32.mxu0 0.0
    %1110 = vmatmul.mubr.f32.gmra.mrb[0].mxu0 %v1043
    %v1111 = vpop.f32.mrb[0].mxu0
    %v1112 = vadd.f32 0.0, %v1111
    %v1113 = vpop.f32.mrb[0].mxu0
    %1114 = vdwg.mxu0
    %v1116 = vsel %vm735, %v845, 0
    %1118 = vmatprep.subr.mxu0 0.0
    %1119 = vmatpush1.msra.mxu0 %v104
    %1120 = vmatprep.subr.mxu0 0.0
    %1121 = vmatpush1.msra.mxu0 0.0
    %1122 = vmatprep.subr.mxu0 0.0
    %1123 = vmatpush1.msra.mxu0 0.0
    %1124 = vmatprep.subr.mxu0 0.0
    %1125 = vmatpush1.msra.mxu0 0.0
    %1126 = vmatprep.subr.mxu0 0.0
    %1127 = vmatpush1.msra.mxu0 0.0
    %1128 = vmatprep.subr.mxu0 0.0
    %1129 = vmatpush1.msra.mxu0 0.0
    %1130 = vmatprep.subr.mxu0 0.0
    %1131 = vmatpush1.msra.mxu0 0.0
    %1132 = vmatprep.subr.mxu0 0.0
    %1133 = vmatpush1.msra.mxu0 0.0
    %1134 = vmatprep.subr.mxu0 0.0
    %1135 = vmatpush1.msra.mxu0 0.0
    %1136 = vmatprep.subr.mxu0 0.0
    %1137 = vmatpush1.msra.mxu0 0.0
    %1138 = vmatprep.subr.mxu0 0.0
    %1139 = vmatpush1.msra.mxu0 0.0
    %1140 = vmatprep.subr.mxu0 0.0
    %1141 = vmatpush1.msra.mxu0 0.0
    %1142 = vmatprep.subr.mxu0 0.0
    %1143 = vmatpush1.msra.mxu0 0.0
    %1144 = vmatprep.subr.mxu0 0.0
    %1145 = vmatpush1.msra.mxu0 0.0
    %1146 = vmatprep.subr.mxu0 0.0
    %1147 = vmatpush1.msra.mxu0 0.0
    %1148 = vmatprep.subr.mxu0 0.0
    %1149 = vmatpush1.msra.mxu0 0.0
    %1150 = vmatprep.subr.mxu0 0.0
    %1151 = vmatpush1.msra.mxu0 0.0
    %1152 = vmatprep.subr.mxu0 0.0
    %1153 = vmatpush1.msra.mxu0 0.0
    %1154 = vmatprep.subr.mxu0 0.0
    %1155 = vmatpush1.msra.mxu0 0.0
    %1156 = vmatprep.subr.mxu0 0.0
    %1157 = vmatpush1.msra.mxu0 0.0
    %1158 = vmatprep.subr.mxu0 0.0
    %1159 = vmatpush1.msra.mxu0 0.0
    %1160 = vmatprep.subr.mxu0 0.0
    %1161 = vmatpush1.msra.mxu0 0.0
    %1162 = vmatprep.subr.mxu0 0.0
    %1163 = vmatpush1.msra.mxu0 0.0
    %1164 = vmatprep.subr.mxu0 0.0
    %1165 = vmatpush1.msra.mxu0 0.0
    %1166 = vmatprep.subr.mxu0 0.0
    %1167 = vmatpush1.msra.mxu0 0.0
    %1168 = vmatprep.subr.mxu0 0.0
    %1169 = vmatpush1.msra.mxu0 0.0
    %1170 = vmatprep.subr.mxu0 0.0
    %1171 = vmatpush1.msra.mxu0 0.0
    %1172 = vmatprep.subr.mxu0 0.0
    %1173 = vmatpush1.msra.mxu0 0.0
    %1174 = vmatprep.subr.mxu0 0.0
    %1175 = vmatpush1.msra.mxu0 0.0
    %1176 = vmatprep.subr.mxu0 0.0
    %1177 = vmatpush1.msra.mxu0 0.0
    %1178 = vmatprep.subr.mxu0 0.0
    %1179 = vmatpush1.msra.mxu0 0.0
    %1180 = vmatprep.subr.mxu0 0.0
    %1181 = vmatpush1.msra.mxu0 0.0
    %1182 = vmatprep.mubr.f32.mxu0 0.0
    %1183 = vmatmul.mubr.f32.gmra.mrb[0].mxu0 %v1116
    %v1184 = vpop.f32.mrb[0].mxu0
    %v1185 = vadd.f32 0.0, %v1184
    %v1186 = vpop.f32.mrb[0].mxu0
    %1187 = vdwg.mxu0
    %v1189 = vsel %vm735, %v847, 0
    %1191 = vmatprep.subr.mxu0 0.0
    %1192 = vmatpush1.msra.mxu0 %v105
    %1193 = vmatprep.subr.mxu0 0.0
    %1194 = vmatpush1.msra.mxu0 0.0
    %1195 = vmatprep.subr.mxu0 0.0
    %1196 = vmatpush1.msra.mxu0 0.0
    %1197 = vmatprep.subr.mxu0 0.0
    %1198 = vmatpush1.msra.mxu0 0.0
    %1199 = vmatprep.subr.mxu0 0.0
    %1200 = vmatpush1.msra.mxu0 0.0
    %1201 = vmatprep.subr.mxu0 0.0
    %1202 = vmatpush1.msra.mxu0 0.0
    %1203 = vmatprep.subr.mxu0 0.0
    %1204 = vmatpush1.msra.mxu0 0.0
    %1205 = vmatprep.subr.mxu0 0.0
    %1206 = vmatpush1.msra.mxu0 0.0
    %1207 = vmatprep.subr.mxu0 0.0
    %1208 = vmatpush1.msra.mxu0 0.0
    %1209 = vmatprep.subr.mxu0 0.0
    %1210 = vmatpush1.msra.mxu0 0.0
    %1211 = vmatprep.subr.mxu0 0.0
    %1212 = vmatpush1.msra.mxu0 0.0
    %1213 = vmatprep.subr.mxu0 0.0
    %1214 = vmatpush1.msra.mxu0 0.0
    %1215 = vmatprep.subr.mxu0 0.0
    %1216 = vmatpush1.msra.mxu0 0.0
    %1217 = vmatprep.subr.mxu0 0.0
    %1218 = vmatpush1.msra.mxu0 0.0
    %1219 = vmatprep.subr.mxu0 0.0
    %1220 = vmatpush1.msra.mxu0 0.0
    %1221 = vmatprep.subr.mxu0 0.0
    %1222 = vmatpush1.msra.mxu0 0.0
    %1223 = vmatprep.subr.mxu0 0.0
    %1224 = vmatpush1.msra.mxu0 0.0
    %1225 = vmatprep.subr.mxu0 0.0
    %1226 = vmatpush1.msra.mxu0 0.0
    %1227 = vmatprep.subr.mxu0 0.0
    %1228 = vmatpush1.msra.mxu0 0.0
    %1229 = vmatprep.subr.mxu0 0.0
    %1230 = vmatpush1.msra.mxu0 0.0
    %1231 = vmatprep.subr.mxu0 0.0
    %1232 = vmatpush1.msra.mxu0 0.0
    %1233 = vmatprep.subr.mxu0 0.0
    %1234 = vmatpush1.msra.mxu0 0.0
    %1235 = vmatprep.subr.mxu0 0.0
    %1236 = vmatpush1.msra.mxu0 0.0
    %1237 = vmatprep.subr.mxu0 0.0
    %1238 = vmatpush1.msra.mxu0 0.0
    %1239 = vmatprep.subr.mxu0 0.0
    %1240 = vmatpush1.msra.mxu0 0.0
    %1241 = vmatprep.subr.mxu0 0.0
    %1242 = vmatpush1.msra.mxu0 0.0
    %1243 = vmatprep.subr.mxu0 0.0
    %1244 = vmatpush1.msra.mxu0 0.0
    %1245 = vmatprep.subr.mxu0 0.0
    %1246 = vmatpush1.msra.mxu0 0.0
    %1247 = vmatprep.subr.mxu0 0.0
    %1248 = vmatpush1.msra.mxu0 0.0
    %1249 = vmatprep.subr.mxu0 0.0
    %1250 = vmatpush1.msra.mxu0 0.0
    %1251 = vmatprep.subr.mxu0 0.0
    %1252 = vmatpush1.msra.mxu0 0.0
    %1253 = vmatprep.subr.mxu0 0.0
    %1254 = vmatpush1.msra.mxu0 0.0
    %1255 = vmatprep.mubr.f32.mxu0 0.0
    %1256 = vmatmul.mubr.f32.gmra.mrb[0].mxu0 %v1189
    %v1257 = vpop.f32.mrb[0].mxu0
    %v1258 = vadd.f32 0.0, %v1257
    %v1259 = vpop.f32.mrb[0].mxu0
    %1260 = vdwg.mxu0
    %v1262 = vsel %vm735, %v849, 0
    %1264 = vmatprep.subr.mxu0 0.0
    %1265 = vmatpush1.msra.mxu0 %v106
    %1266 = vmatprep.subr.mxu0 0.0
    %1267 = vmatpush1.msra.mxu0 0.0
    %1268 = vmatprep.subr.mxu0 0.0
    %1269 = vmatpush1.msra.mxu0 0.0
    %1270 = vmatprep.subr.mxu0 0.0
    %1271 = vmatpush1.msra.mxu0 0.0
    %1272 = vmatprep.subr.mxu0 0.0
    %1273 = vmatpush1.msra.mxu0 0.0
    %1274 = vmatprep.subr.mxu0 0.0
    %1275 = vmatpush1.msra.mxu0 0.0
    %1276 = vmatprep.subr.mxu0 0.0
    %1277 = vmatpush1.msra.mxu0 0.0
    %1278 = vmatprep.subr.mxu0 0.0
    %1279 = vmatpush1.msra.mxu0 0.0
    %1280 = vmatprep.subr.mxu0 0.0
    %1281 = vmatpush1.msra.mxu0 0.0
    %1282 = vmatprep.subr.mxu0 0.0
    %1283 = vmatpush1.msra.mxu0 0.0
    %1284 = vmatprep.subr.mxu0 0.0
    %1285 = vmatpush1.msra.mxu0 0.0
    %1286 = vmatprep.subr.mxu0 0.0
    %1287 = vmatpush1.msra.mxu0 0.0
    %1288 = vmatprep.subr.mxu0 0.0
    %1289 = vmatpush1.msra.mxu0 0.0
    %1290 = vmatprep.subr.mxu0 0.0
    %1291 = vmatpush1.msra.mxu0 0.0
    %1292 = vmatprep.subr.mxu0 0.0
    %1293 = vmatpush1.msra.mxu0 0.0
    %1294 = vmatprep.subr.mxu0 0.0
    %1295 = vmatpush1.msra.mxu0 0.0
    %1296 = vmatprep.subr.mxu0 0.0
    %1297 = vmatpush1.msra.mxu0 0.0
    %1298 = vmatprep.subr.mxu0 0.0
    %1299 = vmatpush1.msra.mxu0 0.0
    %1300 = vmatprep.subr.mxu0 0.0
    %1301 = vmatpush1.msra.mxu0 0.0
    %1302 = vmatprep.subr.mxu0 0.0
    %1303 = vmatpush1.msra.mxu0 0.0
    %1304 = vmatprep.subr.mxu0 0.0
    %1305 = vmatpush1.msra.mxu0 0.0
    %1306 = vmatprep.subr.mxu0 0.0
    %1307 = vmatpush1.msra.mxu0 0.0
    %1308 = vmatprep.subr.mxu0 0.0
    %1309 = vmatpush1.msra.mxu0 0.0
    %1310 = vmatprep.subr.mxu0 0.0
    %1311 = vmatpush1.msra.mxu0 0.0
    %1312 = vmatprep.subr.mxu0 0.0
    %1313 = vmatpush1.msra.mxu0 0.0
    %1314 = vmatprep.subr.mxu0 0.0
    %1315 = vmatpush1.msra.mxu0 0.0
    %1316 = vmatprep.subr.mxu0 0.0
    %1317 = vmatpush1.msra.mxu0 0.0
    %1318 = vmatprep.subr.mxu0 0.0
    %1319 = vmatpush1.msra.mxu0 0.0
    %1320 = vmatprep.subr.mxu0 0.0
    %1321 = vmatpush1.msra.mxu0 0.0
    %1322 = vmatprep.subr.mxu0 0.0
    %1323 = vmatpush1.msra.mxu0 0.0
    %1324 = vmatprep.subr.mxu0 0.0
    %1325 = vmatpush1.msra.mxu0 0.0
    %1326 = vmatprep.subr.mxu0 0.0
    %1327 = vmatpush1.msra.mxu0 0.0
    %1328 = vmatprep.mubr.f32.mxu0 0.0
    %1329 = vmatmul.mubr.f32.gmra.mrb[0].mxu0 %v1262
    %v1330 = vpop.f32.mrb[0].mxu0
    %v1331 = vadd.f32 0.0, %v1330
    %v1332 = vpop.f32.mrb[0].mxu0
    %1333 = vdwg.mxu0
    %v1335 = vsel %vm735, %v851, 0
    %1337 = vmatprep.subr.mxu0 0.0
    %1338 = vmatpush1.msra.mxu0 %v107
    %1339 = vmatprep.subr.mxu0 0.0
    %1340 = vmatpush1.msra.mxu0 0.0
    %1341 = vmatprep.subr.mxu0 0.0
    %1342 = vmatpush1.msra.mxu0 0.0
    %1343 = vmatprep.subr.mxu0 0.0
    %1344 = vmatpush1.msra.mxu0 0.0
    %1345 = vmatprep.subr.mxu0 0.0
    %1346 = vmatpush1.msra.mxu0 0.0
    %1347 = vmatprep.subr.mxu0 0.0
    %1348 = vmatpush1.msra.mxu0 0.0
    %1349 = vmatprep.subr.mxu0 0.0
    %1350 = vmatpush1.msra.mxu0 0.0
    %1351 = vmatprep.subr.mxu0 0.0
    %1352 = vmatpush1.msra.mxu0 0.0
    %1353 = vmatprep.subr.mxu0 0.0
    %1354 = vmatpush1.msra.mxu0 0.0
    %1355 = vmatprep.subr.mxu0 0.0
    %1356 = vmatpush1.msra.mxu0 0.0
    %1357 = vmatprep.subr.mxu0 0.0
    %1358 = vmatpush1.msra.mxu0 0.0
    %1359 = vmatprep.subr.mxu0 0.0
    %1360 = vmatpush1.msra.mxu0 0.0
    %1361 = vmatprep.subr.mxu0 0.0
    %1362 = vmatpush1.msra.mxu0 0.0
    %1363 = vmatprep.subr.mxu0 0.0
    %1364 = vmatpush1.msra.mxu0 0.0
    %1365 = vmatprep.subr.mxu0 0.0
    %1366 = vmatpush1.msra.mxu0 0.0
    %1367 = vmatprep.subr.mxu0 0.0
    %1368 = vmatpush1.msra.mxu0 0.0
    %1369 = vmatprep.subr.mxu0 0.0
    %1370 = vmatpush1.msra.mxu0 0.0
    %1371 = vmatprep.subr.mxu0 0.0
    %1372 = vmatpush1.msra.mxu0 0.0
    %1373 = vmatprep.subr.mxu0 0.0
    %1374 = vmatpush1.msra.mxu0 0.0
    %1375 = vmatprep.subr.mxu0 0.0
    %1376 = vmatpush1.msra.mxu0 0.0
    %1377 = vmatprep.subr.mxu0 0.0
    %1378 = vmatpush1.msra.mxu0 0.0
    %1379 = vmatprep.subr.mxu0 0.0
    %1380 = vmatpush1.msra.mxu0 0.0
    %1381 = vmatprep.subr.mxu0 0.0
    %1382 = vmatpush1.msra.mxu0 0.0
    %1383 = vmatprep.subr.mxu0 0.0
    %1384 = vmatpush1.msra.mxu0 0.0
    %1385 = vmatprep.subr.mxu0 0.0
    %1386 = vmatpush1.msra.mxu0 0.0
    %1387 = vmatprep.subr.mxu0 0.0
    %1388 = vmatpush1.msra.mxu0 0.0
    %1389 = vmatprep.subr.mxu0 0.0
    %1390 = vmatpush1.msra.mxu0 0.0
    %1391 = vmatprep.subr.mxu0 0.0
    %1392 = vmatpush1.msra.mxu0 0.0
    %1393 = vmatprep.subr.mxu0 0.0
    %1394 = vmatpush1.msra.mxu0 0.0
    %1395 = vmatprep.subr.mxu0 0.0
    %1396 = vmatpush1.msra.mxu0 0.0
    %1397 = vmatprep.subr.mxu0 0.0
    %1398 = vmatpush1.msra.mxu0 0.0
    %1399 = vmatprep.subr.mxu0 0.0
    %1400 = vmatpush1.msra.mxu0 0.0
    %1401 = vmatprep.mubr.f32.mxu0 0.0
    %1402 = vmatmul.mubr.f32.gmra.mrb[0].mxu0 %v1335
    %v1403 = vpop.f32.mrb[0].mxu0
    %v1404 = vadd.f32 0.0, %v1403
    %v1405 = vpop.f32.mrb[0].mxu0
    %1406 = vdwg.mxu0
    %v1408 = vsel %vm735, %v853, 0
    %1410 = vmatprep.subr.mxu0 0.0
    %1411 = vmatpush1.msra.mxu0 %v108
    %1412 = vmatprep.subr.mxu0 0.0
    %1413 = vmatpush1.msra.mxu0 0.0
    %1414 = vmatprep.subr.mxu0 0.0
    %1415 = vmatpush1.msra.mxu0 0.0
    %1416 = vmatprep.subr.mxu0 0.0
    %1417 = vmatpush1.msra.mxu0 0.0
    %1418 = vmatprep.subr.mxu0 0.0
    %1419 = vmatpush1.msra.mxu0 0.0
    %1420 = vmatprep.subr.mxu0 0.0
    %1421 = vmatpush1.msra.mxu0 0.0
    %1422 = vmatprep.subr.mxu0 0.0
    %1423 = vmatpush1.msra.mxu0 0.0
    %1424 = vmatprep.subr.mxu0 0.0
    %1425 = vmatpush1.msra.mxu0 0.0
    %1426 = vmatprep.subr.mxu0 0.0
    %1427 = vmatpush1.msra.mxu0 0.0
    %1428 = vmatprep.subr.mxu0 0.0
    %1429 = vmatpush1.msra.mxu0 0.0
    %1430 = vmatprep.subr.mxu0 0.0
    %1431 = vmatpush1.msra.mxu0 0.0
    %1432 = vmatprep.subr.mxu0 0.0
    %1433 = vmatpush1.msra.mxu0 0.0
    %1434 = vmatprep.subr.mxu0 0.0
    %1435 = vmatpush1.msra.mxu0 0.0
    %1436 = vmatprep.subr.mxu0 0.0
    %1437 = vmatpush1.msra.mxu0 0.0
    %1438 = vmatprep.subr.mxu0 0.0
    %1439 = vmatpush1.msra.mxu0 0.0
    %1440 = vmatprep.subr.mxu0 0.0
    %1441 = vmatpush1.msra.mxu0 0.0
    %1442 = vmatprep.subr.mxu0 0.0
    %1443 = vmatpush1.msra.mxu0 0.0
    %1444 = vmatprep.subr.mxu0 0.0
    %1445 = vmatpush1.msra.mxu0 0.0
    %1446 = vmatprep.subr.mxu0 0.0
    %1447 = vmatpush1.msra.mxu0 0.0
    %1448 = vmatprep.subr.mxu0 0.0
    %1449 = vmatpush1.msra.mxu0 0.0
    %1450 = vmatprep.subr.mxu0 0.0
    %1451 = vmatpush1.msra.mxu0 0.0
    %1452 = vmatprep.subr.mxu0 0.0
    %1453 = vmatpush1.msra.mxu0 0.0
    %1454 = vmatprep.subr.mxu0 0.0
    %1455 = vmatpush1.msra.mxu0 0.0
    %1456 = vmatprep.subr.mxu0 0.0
    %1457 = vmatpush1.msra.mxu0 0.0
    %1458 = vmatprep.subr.mxu0 0.0
    %1459 = vmatpush1.msra.mxu0 0.0
    %1460 = vmatprep.subr.mxu0 0.0
    %1461 = vmatpush1.msra.mxu0 0.0
    %1462 = vmatprep.subr.mxu0 0.0
    %1463 = vmatpush1.msra.mxu0 0.0
    %1464 = vmatprep.subr.mxu0 0.0
    %1465 = vmatpush1.msra.mxu0 0.0
    %1466 = vmatprep.subr.mxu0 0.0
    %1467 = vmatpush1.msra.mxu0 0.0
    %1468 = vmatprep.subr.mxu0 0.0
    %1469 = vmatpush1.msra.mxu0 0.0
    %1470 = vmatprep.subr.mxu0 0.0
    %1471 = vmatpush1.msra.mxu0 0.0
    %1472 = vmatprep.subr.mxu0 0.0
    %1473 = vmatpush1.msra.mxu0 0.0
    %1474 = vmatprep.mubr.f32.mxu0 0.0
    %1475 = vmatmul.mubr.f32.gmra.mrb[0].mxu0 %v1408
    %v1476 = vpop.f32.mrb[0].mxu0
    %v1477 = vadd.f32 0.0, %v1476
    %v1478 = vpop.f32.mrb[0].mxu0
    %1479 = vdwg.mxu0
    %v1481 = vsel %vm735, %v855, 0
    %1483 = vmatprep.subr.mxu0 0.0
    %1484 = vmatpush1.msra.mxu0 %v109
    %1485 = vmatprep.subr.mxu0 0.0
    %1486 = vmatpush1.msra.mxu0 0.0
    %1487 = vmatprep.subr.mxu0 0.0
    %1488 = vmatpush1.msra.mxu0 0.0
    %1489 = vmatprep.subr.mxu0 0.0
    %1490 = vmatpush1.msra.mxu0 0.0
    %1491 = vmatprep.subr.mxu0 0.0
    %1492 = vmatpush1.msra.mxu0 0.0
    %1493 = vmatprep.subr.mxu0 0.0
    %1494 = vmatpush1.msra.mxu0 0.0
    %1495 = vmatprep.subr.mxu0 0.0
    %1496 = vmatpush1.msra.mxu0 0.0
    %1497 = vmatprep.subr.mxu0 0.0
    %1498 = vmatpush1.msra.mxu0 0.0
    %1499 = vmatprep.subr.mxu0 0.0
    %1500 = vmatpush1.msra.mxu0 0.0
    %1501 = vmatprep.subr.mxu0 0.0
    %1502 = vmatpush1.msra.mxu0 0.0
    %1503 = vmatprep.subr.mxu0 0.0
    %1504 = vmatpush1.msra.mxu0 0.0
    %1505 = vmatprep.subr.mxu0 0.0
    %1506 = vmatpush1.msra.mxu0 0.0
    %1507 = vmatprep.subr.mxu0 0.0
    %1508 = vmatpush1.msra.mxu0 0.0
    %1509 = vmatprep.subr.mxu0 0.0
    %1510 = vmatpush1.msra.mxu0 0.0
    %1511 = vmatprep.subr.mxu0 0.0
    %1512 = vmatpush1.msra.mxu0 0.0
    %1513 = vmatprep.subr.mxu0 0.0
    %1514 = vmatpush1.msra.mxu0 0.0
    %1515 = vmatprep.subr.mxu0 0.0
    %1516 = vmatpush1.msra.mxu0 0.0
    %1517 = vmatprep.subr.mxu0 0.0
    %1518 = vmatpush1.msra.mxu0 0.0
    %1519 = vmatprep.subr.mxu0 0.0
    %1520 = vmatpush1.msra.mxu0 0.0
    %1521 = vmatprep.subr.mxu0 0.0
    %1522 = vmatpush1.msra.mxu0 0.0
    %1523 = vmatprep.subr.mxu0 0.0
    %1524 = vmatpush1.msra.mxu0 0.0
    %1525 = vmatprep.subr.mxu0 0.0
    %1526 = vmatpush1.msra.mxu0 0.0
    %1527 = vmatprep.subr.mxu0 0.0
    %1528 = vmatpush1.msra.mxu0 0.0
    %1529 = vmatprep.subr.mxu0 0.0
    %1530 = vmatpush1.msra.mxu0 0.0
    %1531 = vmatprep.subr.mxu0 0.0
    %1532 = vmatpush1.msra.mxu0 0.0
    %1533 = vmatprep.subr.mxu0 0.0
    %1534 = vmatpush1.msra.mxu0 0.0
    %1535 = vmatprep.subr.mxu0 0.0
    %1536 = vmatpush1.msra.mxu0 0.0
    %1537 = vmatprep.subr.mxu0 0.0
    %1538 = vmatpush1.msra.mxu0 0.0
    %1539 = vmatprep.subr.mxu0 0.0
    %1540 = vmatpush1.msra.mxu0 0.0
    %1541 = vmatprep.subr.mxu0 0.0
    %1542 = vmatpush1.msra.mxu0 0.0
    %1543 = vmatprep.subr.mxu0 0.0
    %1544 = vmatpush1.msra.mxu0 0.0
    %1545 = vmatprep.subr.mxu0 0.0
    %1546 = vmatpush1.msra.mxu0 0.0
    %1547 = vmatprep.mubr.f32.mxu0 0.0
    %1548 = vmatmul.mubr.f32.gmra.mrb[0].mxu0 %v1481
    %v1549 = vpop.f32.mrb[0].mxu0
    %v1550 = vadd.f32 0.0, %v1549
    %v1551 = vpop.f32.mrb[0].mxu0
    %1552 = vdwg.mxu0
    %v1553 = vadd.f32 %v961, %v1039
    %v1554 = vadd.f32 %v962, %v1112
    %v1555 = vadd.f32 %v963, %v1185
    %v1556 = vadd.f32 %v964, %v1258
    %v1557 = vadd.f32 %v965, %v1331
    %v1558 = vadd.f32 %v966, %v1404
    %v1559 = vadd.f32 %v967, %v1477
    %v1560 = vadd.f32 %v968, %v1550
    %1561 = vst.msk [vmem:[#allocation4] sm:$0xff] %vm110, %v1553
    %1562 = vst.msk [vmem:[#allocation4 + $0x8] sm:$0xff] %vm110, %v1554
    %1563 = vst.msk [vmem:[#allocation4 + $0x10] sm:$0xff] %vm110, %v1555
    %1564 = vst.msk [vmem:[#allocation4 + $0x18] sm:$0xff] %vm110, %v1556
    %1565 = vst.msk [vmem:[#allocation4 + $0x20] sm:$0xff] %vm110, %v1557
    %1566 = vst.msk [vmem:[#allocation4 + $0x28] sm:$0xff] %vm110, %v1558
    %1567 = vst.msk [vmem:[#allocation4 + $0x30] sm:$0xff] %vm110, %v1559
    %1568 = vst.msk [vmem:[#allocation4 + $0x38] sm:$0xff] %vm110, %v1560
    %1569 = vst.msk [vmem:[#allocation2] sm:$0xff] %vm904, %v760
    %1570 = vst.msk [vmem:[#allocation2 + $0x8] sm:$0xff] %vm904, %v761
    %1571 = vst.msk [vmem:[#allocation2 + $0x10] sm:$0xff] %vm904, %v762
    %1572 = vst.msk [vmem:[#allocation2 + $0x18] sm:$0xff] %vm904, %v763
    %1573 = vst.msk [vmem:[#allocation2 + $0x20] sm:$0xff] %vm904, %v764
    %1574 = vst.msk [vmem:[#allocation2 + $0x28] sm:$0xff] %vm904, %v765
    %1575 = vst.msk [vmem:[#allocation2 + $0x30] sm:$0xff] %vm904, %v766
    %1576 = vst.msk [vmem:[#allocation2 + $0x38] sm:$0xff] %vm904, %v767
    // Predicated region
    $region30: #{tpu_custom_call.1} parent=1 // pred_check
      %p1577 = pneg %p56
    $region31: #{tpu_custom_call.1} parent=1 // pred_check_branch
      %1579 = sbr.rel (%p1577) target = $region33
    $region32: #{tpu_custom_call.1} parent=1 // pred_region
      %v1580 = vld [vmem:[#allocation4] sm:$0xff]
      %v1581 = vld [vmem:[#allocation4 + $0x8] sm:$0xff]
      %v1582 = vld [vmem:[#allocation4 + $0x10] sm:$0xff]
      %v1583 = vld [vmem:[#allocation4 + $0x18] sm:$0xff]
      %v1584 = vld [vmem:[#allocation4 + $0x20] sm:$0xff]
      %v1585 = vld [vmem:[#allocation4 + $0x28] sm:$0xff]
      %v1586 = vld [vmem:[#allocation4 + $0x30] sm:$0xff]
      %v1587 = vld [vmem:[#allocation4 + $0x38] sm:$0xff]
      %v1588 = vld [vmem:[#allocation3] sm:$0xff]
      %v1589 = vld [vmem:[#allocation3 + $0x8] sm:$0xff]
      %v1590 = vld [vmem:[#allocation3 + $0x10] sm:$0xff]
      %v1591 = vld [vmem:[#allocation3 + $0x18] sm:$0xff]
      %v1592 = vld [vmem:[#allocation3 + $0x20] sm:$0xff]
      %v1593 = vld [vmem:[#allocation3 + $0x28] sm:$0xff]
      %v1594 = vld [vmem:[#allocation3 + $0x30] sm:$0xff]
      %v1595 = vld [vmem:[#allocation3 + $0x38] sm:$0xff]
      %1597 = vset.pattern.permute.xlu0 0
      %1598 = vperm.xlu0 %1597, %v1588
      %v1599 = vpop.permute.xlu0 %1598
      %1602 = vset.pattern.permute.xlu0 0
      %1603 = vperm.xlu0 %1602, %v1589
      %v1604 = vpop.permute.xlu0 %1603
      %1607 = vset.pattern.permute.xlu0 0
      %1608 = vperm.xlu0 %1607, %v1590
      %v1609 = vpop.permute.xlu0 %1608
      %1612 = vset.pattern.permute.xlu0 0
      %1613 = vperm.xlu0 %1612, %v1591
      %v1614 = vpop.permute.xlu0 %1613
      %1617 = vset.pattern.permute.xlu0 0
      %1618 = vperm.xlu0 %1617, %v1592
      %v1619 = vpop.permute.xlu0 %1618
      %1622 = vset.pattern.permute.xlu0 0
      %1623 = vperm.xlu0 %1622, %v1593
      %v1624 = vpop.permute.xlu0 %1623
      %1627 = vset.pattern.permute.xlu0 0
      %1628 = vperm.xlu0 %1627, %v1594
      %v1629 = vpop.permute.xlu0 %1628
      %1632 = vset.pattern.permute.xlu0 0
      %1633 = vperm.xlu0 %1632, %v1595
      %v1634 = vpop.permute.xlu0 %1633
      %v1636 = vrcp.pop %v1599
      %v1637 = vmul.f32 %v1580, %v1636
      %v1638 = vrcp.pop %v1604
      %v1639 = vmul.f32 %v1581, %v1638
      %v1640 = vrcp.pop %v1609
      %v1641 = vmul.f32 %v1582, %v1640
      %v1642 = vrcp.pop %v1614
      %v1643 = vmul.f32 %v1583, %v1642
      %v1644 = vrcp.pop %v1619
      %v1645 = vmul.f32 %v1584, %v1644
      %v1646 = vrcp.pop %v1624
      %v1647 = vmul.f32 %v1585, %v1646
      %v1648 = vrcp.pop %v1629
      %v1649 = vmul.f32 %v1586, %v1648
      %v1650 = vrcp.pop %v1634
      %v1651 = vmul.f32 %v1587, %v1650
      %1652 = vst.msk [vmem:[#allocation11] sm:$0xff] %vm110, %v1637
      %1653 = vst.msk [vmem:[#allocation11 + $0x8] sm:$0xff] %vm110, %v1639
      %1654 = vst.msk [vmem:[#allocation11 + $0x10] sm:$0xff] %vm110, %v1641
      %1655 = vst.msk [vmem:[#allocation11 + $0x18] sm:$0xff] %vm110, %v1643
      %1656 = vst.msk [vmem:[#allocation11 + $0x20] sm:$0xff] %vm110, %v1645
      %1657 = vst.msk [vmem:[#allocation11 + $0x28] sm:$0xff] %vm110, %v1647
      %1658 = vst.msk [vmem:[#allocation11 + $0x30] sm:$0xff] %vm110, %v1649
      %1659 = vst.msk [vmem:[#allocation11 + $0x38] sm:$0xff] %vm110, %v1651
    $region33: #{tpu_custom_call.1} parent=1 // pred_fallthru
      _
    // Predicated region
    $region34: #{tpu_custom_call.1} parent=1 // pred_check
      _
    $region35: #{tpu_custom_call.1} parent=1 // pred_check_branch
      %1661 = sbr.rel (0) target = $region37
    $region36: #{tpu_custom_call.1} parent=1 // pred_region
      %s1663 = ssub.s32 1024, 1024
      %1664 = vsyncadd [#allocation7], %s1663
      %s1665 = sshll.u32 [#allocation11], 4
      %s1666 = int_to_ptr.vmem [resolvable:$true] %s1665
      %1671 = dma.vmem_to_hbm [thread:$0]  %s1666, 1024, %s3, [#allocation7], 128, 128, 8
    $region37: #{tpu_custom_call.1} parent=1 // pred_fallthru
      _
    // Predicated region
    $region38: #{tpu_custom_call.1} parent=1 // pred_check
      _
    $region39: #{tpu_custom_call.1} parent=1 // pred_check_branch
      %1673 = sbr.rel (0) target = $region41
    $region40: #{tpu_custom_call.1} parent=1 // pred_region
      %1674 = dma.done [#allocation7], 1024
    $region41: #{tpu_custom_call.1} parent=1 // pred_fallthru
      _
    %1675 = vsyncpa [#allocation6], 1
    %1676 = vsyncpa [#allocation9], 1
    %1677 = vsyncpa [#allocation7], 1

</llo_original>
